<compile_context>
chip_gen: v7x
topology: tpu7x:2x2x1
jax: 0.10.0
libtpu: 0.0.40
codegen_flags: <defaults>
</compile_context>

<pallas_src>
import functools
import math

import jax
import jax.numpy as jnp
from jax import lax
from jax.experimental import pallas as pl
from jax.experimental.pallas import tpu as pltpu


def _round_up(x, m):
    return ((x + m - 1) // m) * m


def _metric_kernel(czz_ref, szz_ref, cxp_ref, sxp_ref, in1_ref, in2_ref,
                   out_ref, *, n_qubits, n_layers, tb):
    dim = 1 << n_qubits
    rows = 2 * tb                       # inputs1-block rows stacked on inputs2-block rows
    inv_sqrt2 = jnp.float32(1.0 / math.sqrt(2.0))

    # ---- batch-invariant bit masks, built once per kernel invocation --------
    idx = lax.broadcasted_iota(jnp.int32, (1, dim), 1)
    bits_f = []                         # (1, dim) float 0/1 mask of qubit q's bit
    for q in range(n_qubits):
        b = (idx >> (n_qubits - 1 - q)) & 1
        bits_f.append(b.astype(jnp.float32))
    zz_sign = []                        # (1, dim) +/-1 mask per neighbour pair (layer-invariant)
    for q in range(n_qubits - 1):
        zz_sign.append((1.0 - 2.0 * bits_f[q]) * (1.0 - 2.0 * bits_f[q + 1]))

    def partner(x, q):
        # amplitude at the index with qubit q's bit flipped (arith blend, no bool select)
        step = 1 << (n_qubits - 1 - q)
        fwd = pltpu.roll(x, shift=dim - step, axis=1)   # x[i + step]
        bwd = pltpu.roll(x, shift=step, axis=1)         # x[i - step]
        return fwd + bits_f[q] * (bwd - fwd)

    # ---- analytic product state after H-wall + RY(x) encoding (purely real) --
    # per-qubit state RY(x_q) H |0> = ((c - s)/sqrt2, (c + s)/sqrt2)
    enc = jnp.concatenate([in1_ref[...], in2_ref[...]], axis=0)   # (2*tb, n_qubits)
    c_enc = jnp.cos(enc * 0.5)
    s_enc = jnp.sin(enc * 0.5)
    f0 = (c_enc - s_enc) * inv_sqrt2    # factor if bit == 0
    f1 = (c_enc + s_enc) * inv_sqrt2    # factor if bit == 1

    a0 = f0[:, 0:1]
    a1 = f1[:, 0:1]
    re = a0 + (a1 - a0) * bits_f[0]
    for q in range(1, n_qubits):
        a0 = f0[:, q:q + 1]
        a1 = f1[:, q:q + 1]
        re = re * (a0 + (a1 - a0) * bits_f[q])
    im = jnp.zeros((rows, dim), jnp.float32)

    # ---- variational layers: ZZ (diagonal) then RX on each qubit -------------
    def layer(l, carry):
        re, im = carry
        for q in range(n_qubits - 1):
            cz = czz_ref[q, l]                       # SMEM scalar
            zs = zz_sign[q] * szz_ref[q, l]          # (1, dim)
            re, im = cz * re + zs * im, cz * im - zs * re
        for q in range(n_qubits):
            cx = cxp_ref[q, l]
            sx = sxp_ref[q, l]
            p_re = partner(re, q)
            p_im = partner(im, q)
            re, im = cx * re + sx * p_im, cx * im - sx * p_re
        return re, im

    re, im = lax.fori_loop(0, n_layers, layer, (re, im))

    # ---- overlap <psi2 | psi1> ------------------------------------------------
    re1, im1 = re[:tb], im[:tb]
    re2, im2 = re[tb:], im[tb:]
    ov_re = jnp.sum(re2 * re1 + im2 * im1, axis=1, keepdims=True)
    ov_im = jnp.sum(re2 * im1 - im2 * re1, axis=1, keepdims=True)
    out_ref[...] = jnp.concatenate([ov_re, ov_im], axis=1)       # (tb, 2)


def optimal_metric_forward(inputs1, inputs2, zz_params, x_params):
    """Pallas implementation of OptimalMetric.forward -> complex64 (B,)."""
    assert inputs1.shape == inputs2.shape
    B, n_qubits = inputs1.shape
    n_layers = x_params.shape[-1]
    dim = 1 << n_qubits

    # Host-side precompute of cos/sin half-angles for the (tiny) circuit params;
    # they are consumed as SMEM scalars inside the kernel.
    zz = jnp.asarray(zz_params, jnp.float32).reshape(n_qubits - 1, n_layers)
    xp = jnp.asarray(x_params, jnp.float32).reshape(n_qubits, n_layers)
    czz, szz = jnp.cos(zz * 0.5), jnp.sin(zz * 0.5)
    cxp, sxp = jnp.cos(xp * 0.5), jnp.sin(xp * 0.5)

    # Batch tile: multiple of 8 sublanes, ~20 MiB of live f32 state per step
    # (re/im + partner temporaries for the stacked 2*TB rows) so it also fits
    # v7x's 64 MiB VMEM; clamp to [8, 256].
    budget_rows = max(8, (20 * 1024 * 1024) // (2 * 10 * dim * 4))
    tb = min(256, budget_rows, _round_up(B, 8))
    tb = max(8, (tb // 8) * 8)
    b_pad = _round_up(B, tb)

    pad = b_pad - B
    in1 = jnp.pad(inputs1.astype(jnp.float32), ((0, pad), (0, 0)))
    in2 = jnp.pad(inputs2.astype(jnp.float32), ((0, pad), (0, 0)))

    kernel = functools.partial(_metric_kernel, n_qubits=n_qubits,
                               n_layers=n_layers, tb=tb)
    out = pl.pallas_call(
        kernel,
        out_shape=jax.ShapeDtypeStruct((b_pad, 2), jnp.float32),
        grid=(b_pad // tb,),
        in_specs=[
            pl.BlockSpec(memory_space=pltpu.MemorySpace.SMEM),   # czz
            pl.BlockSpec(memory_space=pltpu.MemorySpace.SMEM),   # szz
            pl.BlockSpec(memory_space=pltpu.MemorySpace.SMEM),   # cxp
            pl.BlockSpec(memory_space=pltpu.MemorySpace.SMEM),   # sxp
            pl.BlockSpec((tb, n_qubits), lambda i: (i, 0)),      # inputs1 tile
            pl.BlockSpec((tb, n_qubits), lambda i: (i, 0)),      # inputs2 tile
        ],
        out_specs=pl.BlockSpec((tb, 2), lambda i: (i, 0)),
        compiler_params=pltpu.CompilerParams(
            dimension_semantics=("parallel",),
            vmem_limit_bytes=48 * 1024 * 1024,
        ),
    )(czz, szz, cxp, sxp, in1, in2)

    ov = out[:B]
    return lax.complex(ov[:, 0], ov[:, 1])        # complex64, shape (B,)


# ----------------------------------------------------------------------------
# Pure-JAX reference: full gate-by-gate statevector simulation (H-wall + RY
# loops kept explicit so it independently validates the analytic-init shortcut
# used inside the kernel).
# ----------------------------------------------------------------------------
def _reference_simulate(angles, zz, xp, n_qubits, n_layers):
    B = angles.shape[0]
    dim = 1 << n_qubits
    idx = jnp.arange(dim, dtype=jnp.int32)[None, :]
    inv_sqrt2 = jnp.float32(1.0 / math.sqrt(2.0))

    def bit(q):
        return (idx >> (n_qubits - 1 - q)) & 1

    def partner(x, q):
        step = 1 << (n_qubits - 1 - q)
        fwd = jnp.roll(x, dim - step, axis=1)
        bwd = jnp.roll(x, step, axis=1)
        return jnp.where(bit(q) == 0, fwd, bwd)

    re = jnp.where(idx == 0, 1.0, 0.0).astype(jnp.float32) * jnp.ones((B, 1), jnp.float32)
    im = jnp.zeros((B, dim), jnp.float32)
    for q in range(n_qubits):                       # Hadamard wall
        sgn = jnp.where(bit(q) == 0, 1.0, -1.0).astype(jnp.float32)
        p_re, p_im = partner(re, q), partner(im, q)
        re = (p_re + sgn * re) * inv_sqrt2
        im = (p_im + sgn * im) * inv_sqrt2
    c = jnp.cos(angles * 0.5)
    s = jnp.sin(angles * 0.5)
    for q in range(n_qubits):                       # RY(x) encoding
        cc, ss = c[:, q:q + 1], s[:, q:q + 1]
        s_eff = jnp.where(bit(q) == 0, -ss, ss)
        p_re, p_im = partner(re, q), partner(im, q)
        re = cc * re + s_eff * p_re
        im = cc * im + s_eff * p_im
    czz, szz = jnp.cos(zz * 0.5), jnp.sin(zz * 0.5)
    cxp, sxp = jnp.cos(xp * 0.5), jnp.sin(xp * 0.5)
    for l in range(n_layers):                       # variational layers
        for q in range(n_qubits - 1):
            cc, ss = czz[q, l], szz[q, l]
            z = ((1 - 2 * bit(q)) * (1 - 2 * bit(q + 1))).astype(jnp.float32)
            re, im = cc * re + z * ss * im, cc * im - z * ss * re
        for q in range(n_qubits):
            cc, ss = cxp[q, l], sxp[q, l]
            p_re, p_im = partner(re, q), partner(im, q)
            re, im = cc * re + ss * p_im, cc * im - ss * p_re
    return re, im


def _reference_forward(inputs1, inputs2, zz_params, x_params):
    B, n_qubits = inputs1.shape
    n_layers = x_params.shape[-1]
    zz = jnp.asarray(zz_params, jnp.float32).reshape(n_qubits - 1, n_layers)
    xp = jnp.asarray(x_params, jnp.float32).reshape(n_qubits, n_layers)
    re1, im1 = _reference_simulate(inputs1.astype(jnp.float32), zz, xp, n_qubits, n_layers)
    re2, im2 = _reference_simulate(inputs2.astype(jnp.float32), zz, xp, n_qubits, n_layers)
    return lax.complex(jnp.sum(re2 * re1 + im2 * im1, axis=1),
                       jnp.sum(re2 * im1 - im2 * re1, axis=1))


if __name__ == "__main__":
    n_qubits, n_layers, batch = 8, 2, 2

    key = jax.random.PRNGKey(0)
    k1, k2, k3, k4 = jax.random.split(key, 4)
    # Deterministic stand-ins for nn.Parameter(torch.randn(...)) in __init__.
    zz_params = jax.random.normal(k1, (1, n_qubits - 1, n_layers), jnp.float32)
    x_params = jax.random.normal(k2, (1, n_qubits, n_layers), jnp.float32)
    # Forward inputs: (batch, n_qubits) angles.
    inputs1 = jax.random.normal(k3, (batch, n_qubits), jnp.float32)
    inputs2 = jax.random.normal(k4, (batch, n_qubits), jnp.float32)

    out = jax.block_until_ready(
        optimal_metric_forward(inputs1, inputs2, zz_params, x_params))
    ref = jax.block_until_ready(
        _reference_forward(inputs1, inputs2, zz_params, x_params))

    assert out.shape == (batch,) and out.dtype == jnp.complex64
    assert jnp.allclose(out, ref, atol=1e-4, rtol=1e-4)

    # Sanity: self-overlap of a normalized state must have unit magnitude.
    self_ov = jax.block_until_ready(
        optimal_metric_forward(inputs1, inputs1, zz_params, x_params))
    assert jnp.allclose(jnp.abs(self_ov), 1.0, atol=1e-4)

    print("KERNEL_OK")
</pallas_src>

<mosaic_0001>
module attributes {stable_mosaic.version = 11 : i64} {
  func.func @_metric_kernel(%arg0: i32, %arg1: memref<7x2xf32, #tpu.memory_space<smem>>, %arg2: memref<7x2xf32, #tpu.memory_space<smem>>, %arg3: memref<8x2xf32, #tpu.memory_space<smem>>, %arg4: memref<8x2xf32, #tpu.memory_space<smem>>, %arg5: memref<8x8xf32, #tpu.memory_space<vmem>>, %arg6: memref<8x8xf32, #tpu.memory_space<vmem>>, %arg7: memref<8x2xf32, #tpu.memory_space<vmem>>) attributes {dimension_semantics = [#tpu.dimension_semantics<parallel>], iteration_bounds = array<i64: 1>, scalar_prefetch = 0 : i64, scratch_operands = 0 : i64, tpu.core_type = #tpu.core_type<tc>, window_params = [{transform_indices = @transform_0, window_bounds = array<i64: 7, 2>}, {transform_indices = @transform_1, window_bounds = array<i64: 7, 2>}, {transform_indices = @transform_2, window_bounds = array<i64: 8, 2>}, {transform_indices = @transform_3, window_bounds = array<i64: 8, 2>}, {transform_indices = @transform_4, window_bounds = array<i64: 8, 8>}, {transform_indices = @transform_5, window_bounds = array<i64: 8, 8>}, {transform_indices = @transform_6, window_bounds = array<i64: 8, 2>}]} {
    %0 = tpu.iota {dimensions = array<i32: 1>} : vector<1x256xi32>
    %c7_i32 = arith.constant 7 : i32
    %1 = vector.broadcast %c7_i32 : i32 to vector<1x256xi32>
    %2 = arith.shrsi %0, %1 : vector<1x256xi32>
    %c1_i32 = arith.constant 1 : i32
    %3 = vector.broadcast %c1_i32 : i32 to vector<1x256xi32>
    %4 = arith.andi %2, %3 : vector<1x256xi32>
    %5 = arith.sitofp %4 : vector<1x256xi32> to vector<1x256xf32>
    %c6_i32 = arith.constant 6 : i32
    %6 = vector.broadcast %c6_i32 : i32 to vector<1x256xi32>
    %7 = arith.shrsi %0, %6 : vector<1x256xi32>
    %c1_i32_0 = arith.constant 1 : i32
    %8 = vector.broadcast %c1_i32_0 : i32 to vector<1x256xi32>
    %9 = arith.andi %7, %8 : vector<1x256xi32>
    %10 = arith.sitofp %9 : vector<1x256xi32> to vector<1x256xf32>
    %c5_i32 = arith.constant 5 : i32
    %11 = vector.broadcast %c5_i32 : i32 to vector<1x256xi32>
    %12 = arith.shrsi %0, %11 : vector<1x256xi32>
    %c1_i32_1 = arith.constant 1 : i32
    %13 = vector.broadcast %c1_i32_1 : i32 to vector<1x256xi32>
    %14 = arith.andi %12, %13 : vector<1x256xi32>
    %15 = arith.sitofp %14 : vector<1x256xi32> to vector<1x256xf32>
    %c4_i32 = arith.constant 4 : i32
    %16 = vector.broadcast %c4_i32 : i32 to vector<1x256xi32>
    %17 = arith.shrsi %0, %16 : vector<1x256xi32>
    %c1_i32_2 = arith.constant 1 : i32
    %18 = vector.broadcast %c1_i32_2 : i32 to vector<1x256xi32>
    %19 = arith.andi %17, %18 : vector<1x256xi32>
    %20 = arith.sitofp %19 : vector<1x256xi32> to vector<1x256xf32>
    %c3_i32 = arith.constant 3 : i32
    %21 = vector.broadcast %c3_i32 : i32 to vector<1x256xi32>
    %22 = arith.shrsi %0, %21 : vector<1x256xi32>
    %c1_i32_3 = arith.constant 1 : i32
    %23 = vector.broadcast %c1_i32_3 : i32 to vector<1x256xi32>
    %24 = arith.andi %22, %23 : vector<1x256xi32>
    %25 = arith.sitofp %24 : vector<1x256xi32> to vector<1x256xf32>
    %c2_i32 = arith.constant 2 : i32
    %26 = vector.broadcast %c2_i32 : i32 to vector<1x256xi32>
    %27 = arith.shrsi %0, %26 : vector<1x256xi32>
    %c1_i32_4 = arith.constant 1 : i32
    %28 = vector.broadcast %c1_i32_4 : i32 to vector<1x256xi32>
    %29 = arith.andi %27, %28 : vector<1x256xi32>
    %30 = arith.sitofp %29 : vector<1x256xi32> to vector<1x256xf32>
    %c1_i32_5 = arith.constant 1 : i32
    %31 = vector.broadcast %c1_i32_5 : i32 to vector<1x256xi32>
    %32 = arith.shrsi %0, %31 : vector<1x256xi32>
    %c1_i32_6 = arith.constant 1 : i32
    %33 = vector.broadcast %c1_i32_6 : i32 to vector<1x256xi32>
    %34 = arith.andi %32, %33 : vector<1x256xi32>
    %35 = arith.sitofp %34 : vector<1x256xi32> to vector<1x256xf32>
    %c0_i32 = arith.constant 0 : i32
    %36 = vector.broadcast %c0_i32 : i32 to vector<1x256xi32>
    %37 = arith.shrsi %0, %36 : vector<1x256xi32>
    %c1_i32_7 = arith.constant 1 : i32
    %38 = vector.broadcast %c1_i32_7 : i32 to vector<1x256xi32>
    %39 = arith.andi %37, %38 : vector<1x256xi32>
    %40 = arith.sitofp %39 : vector<1x256xi32> to vector<1x256xf32>
    %cst = arith.constant 2.000000e+00 : f32
    %41 = vector.broadcast %cst : f32 to vector<1x256xf32>
    %42 = arith.mulf %41, %5 : vector<1x256xf32>
    %cst_8 = arith.constant 1.000000e+00 : f32
    %43 = vector.broadcast %cst_8 : f32 to vector<1x256xf32>
    %44 = arith.subf %43, %42 : vector<1x256xf32>
    %cst_9 = arith.constant 2.000000e+00 : f32
    %45 = vector.broadcast %cst_9 : f32 to vector<1x256xf32>
    %46 = arith.mulf %45, %10 : vector<1x256xf32>
    %cst_10 = arith.constant 1.000000e+00 : f32
    %47 = vector.broadcast %cst_10 : f32 to vector<1x256xf32>
    %48 = arith.subf %47, %46 : vector<1x256xf32>
    %49 = arith.mulf %44, %48 : vector<1x256xf32>
    %cst_11 = arith.constant 2.000000e+00 : f32
    %50 = vector.broadcast %cst_11 : f32 to vector<1x256xf32>
    %51 = arith.mulf %50, %10 : vector<1x256xf32>
    %cst_12 = arith.constant 1.000000e+00 : f32
    %52 = vector.broadcast %cst_12 : f32 to vector<1x256xf32>
    %53 = arith.subf %52, %51 : vector<1x256xf32>
    %cst_13 = arith.constant 2.000000e+00 : f32
    %54 = vector.broadcast %cst_13 : f32 to vector<1x256xf32>
    %55 = arith.mulf %54, %15 : vector<1x256xf32>
    %cst_14 = arith.constant 1.000000e+00 : f32
    %56 = vector.broadcast %cst_14 : f32 to vector<1x256xf32>
    %57 = arith.subf %56, %55 : vector<1x256xf32>
    %58 = arith.mulf %53, %57 : vector<1x256xf32>
    %cst_15 = arith.constant 2.000000e+00 : f32
    %59 = vector.broadcast %cst_15 : f32 to vector<1x256xf32>
    %60 = arith.mulf %59, %15 : vector<1x256xf32>
    %cst_16 = arith.constant 1.000000e+00 : f32
    %61 = vector.broadcast %cst_16 : f32 to vector<1x256xf32>
    %62 = arith.subf %61, %60 : vector<1x256xf32>
    %cst_17 = arith.constant 2.000000e+00 : f32
    %63 = vector.broadcast %cst_17 : f32 to vector<1x256xf32>
    %64 = arith.mulf %63, %20 : vector<1x256xf32>
    %cst_18 = arith.constant 1.000000e+00 : f32
    %65 = vector.broadcast %cst_18 : f32 to vector<1x256xf32>
    %66 = arith.subf %65, %64 : vector<1x256xf32>
    %67 = arith.mulf %62, %66 : vector<1x256xf32>
    %cst_19 = arith.constant 2.000000e+00 : f32
    %68 = vector.broadcast %cst_19 : f32 to vector<1x256xf32>
    %69 = arith.mulf %68, %20 : vector<1x256xf32>
    %cst_20 = arith.constant 1.000000e+00 : f32
    %70 = vector.broadcast %cst_20 : f32 to vector<1x256xf32>
    %71 = arith.subf %70, %69 : vector<1x256xf32>
    %cst_21 = arith.constant 2.000000e+00 : f32
    %72 = vector.broadcast %cst_21 : f32 to vector<1x256xf32>
    %73 = arith.mulf %72, %25 : vector<1x256xf32>
    %cst_22 = arith.constant 1.000000e+00 : f32
    %74 = vector.broadcast %cst_22 : f32 to vector<1x256xf32>
    %75 = arith.subf %74, %73 : vector<1x256xf32>
    %76 = arith.mulf %71, %75 : vector<1x256xf32>
    %cst_23 = arith.constant 2.000000e+00 : f32
    %77 = vector.broadcast %cst_23 : f32 to vector<1x256xf32>
    %78 = arith.mulf %77, %25 : vector<1x256xf32>
    %cst_24 = arith.constant 1.000000e+00 : f32
    %79 = vector.broadcast %cst_24 : f32 to vector<1x256xf32>
    %80 = arith.subf %79, %78 : vector<1x256xf32>
    %cst_25 = arith.constant 2.000000e+00 : f32
    %81 = vector.broadcast %cst_25 : f32 to vector<1x256xf32>
    %82 = arith.mulf %81, %30 : vector<1x256xf32>
    %cst_26 = arith.constant 1.000000e+00 : f32
    %83 = vector.broadcast %cst_26 : f32 to vector<1x256xf32>
    %84 = arith.subf %83, %82 : vector<1x256xf32>
    %85 = arith.mulf %80, %84 : vector<1x256xf32>
    %cst_27 = arith.constant 2.000000e+00 : f32
    %86 = vector.broadcast %cst_27 : f32 to vector<1x256xf32>
    %87 = arith.mulf %86, %30 : vector<1x256xf32>
    %cst_28 = arith.constant 1.000000e+00 : f32
    %88 = vector.broadcast %cst_28 : f32 to vector<1x256xf32>
    %89 = arith.subf %88, %87 : vector<1x256xf32>
    %cst_29 = arith.constant 2.000000e+00 : f32
    %90 = vector.broadcast %cst_29 : f32 to vector<1x256xf32>
    %91 = arith.mulf %90, %35 : vector<1x256xf32>
    %cst_30 = arith.constant 1.000000e+00 : f32
    %92 = vector.broadcast %cst_30 : f32 to vector<1x256xf32>
    %93 = arith.subf %92, %91 : vector<1x256xf32>
    %94 = arith.mulf %89, %93 : vector<1x256xf32>
    %cst_31 = arith.constant 2.000000e+00 : f32
    %95 = vector.broadcast %cst_31 : f32 to vector<1x256xf32>
    %96 = arith.mulf %95, %35 : vector<1x256xf32>
    %cst_32 = arith.constant 1.000000e+00 : f32
    %97 = vector.broadcast %cst_32 : f32 to vector<1x256xf32>
    %98 = arith.subf %97, %96 : vector<1x256xf32>
    %cst_33 = arith.constant 2.000000e+00 : f32
    %99 = vector.broadcast %cst_33 : f32 to vector<1x256xf32>
    %100 = arith.mulf %99, %40 : vector<1x256xf32>
    %cst_34 = arith.constant 1.000000e+00 : f32
    %101 = vector.broadcast %cst_34 : f32 to vector<1x256xf32>
    %102 = arith.subf %101, %100 : vector<1x256xf32>
    %103 = arith.mulf %98, %102 : vector<1x256xf32>
    %c0 = arith.constant 0 : index
    %c0_35 = arith.constant 0 : index
    %104 = vector.load %arg5[%c0, %c0_35] : memref<8x8xf32, #tpu.memory_space<vmem>>, vector<8x8xf32>
    %c0_36 = arith.constant 0 : index
    %c0_37 = arith.constant 0 : index
    %105 = vector.load %arg6[%c0_36, %c0_37] : memref<8x8xf32, #tpu.memory_space<vmem>>, vector<8x8xf32>
    %106 = tpu.concatenate %104, %105 in 0 : vector<8x8xf32>, vector<8x8xf32> -> vector<16x8xf32>
    %cst_38 = arith.constant 5.000000e-01 : f32
    %107 = vector.broadcast %cst_38 : f32 to vector<16x8xf32>
    %108 = arith.mulf %106, %107 : vector<16x8xf32>
    %109 = math.cos %108 : vector<16x8xf32>
    %cst_39 = arith.constant 5.000000e-01 : f32
    %110 = vector.broadcast %cst_39 : f32 to vector<16x8xf32>
    %111 = arith.mulf %106, %110 : vector<16x8xf32>
    %112 = math.sin %111 : vector<16x8xf32>
    %113 = arith.subf %109, %112 : vector<16x8xf32>
    %cst_40 = arith.constant 0.707106769 : f32
    %114 = vector.broadcast %cst_40 : f32 to vector<16x8xf32>
    %115 = arith.mulf %113, %114 : vector<16x8xf32>
    %116 = arith.addf %109, %112 : vector<16x8xf32>
    %cst_41 = arith.constant 0.707106769 : f32
    %117 = vector.broadcast %cst_41 : f32 to vector<16x8xf32>
    %118 = arith.mulf %116, %117 : vector<16x8xf32>
    %119 = vector.extract_strided_slice %115 {offsets = [0, 0], sizes = [16, 1], strides = [1, 1]} : vector<16x8xf32> to vector<16x1xf32>
    %120 = vector.extract_strided_slice %118 {offsets = [0, 0], sizes = [16, 1], strides = [1, 1]} : vector<16x8xf32> to vector<16x1xf32>
    %121 = arith.subf %120, %119 : vector<16x1xf32>
    %122 = vector.broadcast %121 : vector<16x1xf32> to vector<16x256xf32>
    %123 = vector.broadcast %5 : vector<1x256xf32> to vector<16x256xf32>
    %124 = arith.mulf %122, %123 : vector<16x256xf32>
    %125 = vector.broadcast %119 : vector<16x1xf32> to vector<16x256xf32>
    %126 = arith.addf %125, %124 : vector<16x256xf32>
    %127 = vector.extract_strided_slice %115 {offsets = [0, 1], sizes = [16, 1], strides = [1, 1]} : vector<16x8xf32> to vector<16x1xf32>
    %128 = vector.extract_strided_slice %118 {offsets = [0, 1], sizes = [16, 1], strides = [1, 1]} : vector<16x8xf32> to vector<16x1xf32>
    %129 = arith.subf %128, %127 : vector<16x1xf32>
    %130 = vector.broadcast %129 : vector<16x1xf32> to vector<16x256xf32>
    %131 = vector.broadcast %10 : vector<1x256xf32> to vector<16x256xf32>
    %132 = arith.mulf %130, %131 : vector<16x256xf32>
    %133 = vector.broadcast %127 : vector<16x1xf32> to vector<16x256xf32>
    %134 = arith.addf %133, %132 : vector<16x256xf32>
    %135 = arith.mulf %126, %134 : vector<16x256xf32>
    %136 = vector.extract_strided_slice %115 {offsets = [0, 2], sizes = [16, 1], strides = [1, 1]} : vector<16x8xf32> to vector<16x1xf32>
    %137 = vector.extract_strided_slice %118 {offsets = [0, 2], sizes = [16, 1], strides = [1, 1]} : vector<16x8xf32> to vector<16x1xf32>
    %138 = arith.subf %137, %136 : vector<16x1xf32>
    %139 = vector.broadcast %138 : vector<16x1xf32> to vector<16x256xf32>
    %140 = vector.broadcast %15 : vector<1x256xf32> to vector<16x256xf32>
    %141 = arith.mulf %139, %140 : vector<16x256xf32>
    %142 = vector.broadcast %136 : vector<16x1xf32> to vector<16x256xf32>
    %143 = arith.addf %142, %141 : vector<16x256xf32>
    %144 = arith.mulf %135, %143 : vector<16x256xf32>
    %145 = vector.extract_strided_slice %115 {offsets = [0, 3], sizes = [16, 1], strides = [1, 1]} : vector<16x8xf32> to vector<16x1xf32>
    %146 = vector.extract_strided_slice %118 {offsets = [0, 3], sizes = [16, 1], strides = [1, 1]} : vector<16x8xf32> to vector<16x1xf32>
    %147 = arith.subf %146, %145 : vector<16x1xf32>
    %148 = vector.broadcast %147 : vector<16x1xf32> to vector<16x256xf32>
    %149 = vector.broadcast %20 : vector<1x256xf32> to vector<16x256xf32>
    %150 = arith.mulf %148, %149 : vector<16x256xf32>
    %151 = vector.broadcast %145 : vector<16x1xf32> to vector<16x256xf32>
    %152 = arith.addf %151, %150 : vector<16x256xf32>
    %153 = arith.mulf %144, %152 : vector<16x256xf32>
    %154 = vector.extract_strided_slice %115 {offsets = [0, 4], sizes = [16, 1], strides = [1, 1]} : vector<16x8xf32> to vector<16x1xf32>
    %155 = vector.extract_strided_slice %118 {offsets = [0, 4], sizes = [16, 1], strides = [1, 1]} : vector<16x8xf32> to vector<16x1xf32>
    %156 = arith.subf %155, %154 : vector<16x1xf32>
    %157 = vector.broadcast %156 : vector<16x1xf32> to vector<16x256xf32>
    %158 = vector.broadcast %25 : vector<1x256xf32> to vector<16x256xf32>
    %159 = arith.mulf %157, %158 : vector<16x256xf32>
    %160 = vector.broadcast %154 : vector<16x1xf32> to vector<16x256xf32>
    %161 = arith.addf %160, %159 : vector<16x256xf32>
    %162 = arith.mulf %153, %161 : vector<16x256xf32>
    %163 = vector.extract_strided_slice %115 {offsets = [0, 5], sizes = [16, 1], strides = [1, 1]} : vector<16x8xf32> to vector<16x1xf32>
    %164 = vector.extract_strided_slice %118 {offsets = [0, 5], sizes = [16, 1], strides = [1, 1]} : vector<16x8xf32> to vector<16x1xf32>
    %165 = arith.subf %164, %163 : vector<16x1xf32>
    %166 = vector.broadcast %165 : vector<16x1xf32> to vector<16x256xf32>
    %167 = vector.broadcast %30 : vector<1x256xf32> to vector<16x256xf32>
    %168 = arith.mulf %166, %167 : vector<16x256xf32>
    %169 = vector.broadcast %163 : vector<16x1xf32> to vector<16x256xf32>
    %170 = arith.addf %169, %168 : vector<16x256xf32>
    %171 = arith.mulf %162, %170 : vector<16x256xf32>
    %172 = vector.extract_strided_slice %115 {offsets = [0, 6], sizes = [16, 1], strides = [1, 1]} : vector<16x8xf32> to vector<16x1xf32>
    %173 = vector.extract_strided_slice %118 {offsets = [0, 6], sizes = [16, 1], strides = [1, 1]} : vector<16x8xf32> to vector<16x1xf32>
    %174 = arith.subf %173, %172 : vector<16x1xf32>
    %175 = vector.broadcast %174 : vector<16x1xf32> to vector<16x256xf32>
    %176 = vector.broadcast %35 : vector<1x256xf32> to vector<16x256xf32>
    %177 = arith.mulf %175, %176 : vector<16x256xf32>
    %178 = vector.broadcast %172 : vector<16x1xf32> to vector<16x256xf32>
    %179 = arith.addf %178, %177 : vector<16x256xf32>
    %180 = arith.mulf %171, %179 : vector<16x256xf32>
    %181 = vector.extract_strided_slice %115 {offsets = [0, 7], sizes = [16, 1], strides = [1, 1]} : vector<16x8xf32> to vector<16x1xf32>
    %182 = vector.extract_strided_slice %118 {offsets = [0, 7], sizes = [16, 1], strides = [1, 1]} : vector<16x8xf32> to vector<16x1xf32>
    %183 = arith.subf %182, %181 : vector<16x1xf32>
    %184 = vector.broadcast %183 : vector<16x1xf32> to vector<16x256xf32>
    %185 = vector.broadcast %40 : vector<1x256xf32> to vector<16x256xf32>
    %186 = arith.mulf %184, %185 : vector<16x256xf32>
    %187 = vector.broadcast %181 : vector<16x1xf32> to vector<16x256xf32>
    %188 = arith.addf %187, %186 : vector<16x256xf32>
    %189 = arith.mulf %180, %188 : vector<16x256xf32>
    %cst_42 = arith.constant 0.000000e+00 : f32
    %190 = vector.broadcast %cst_42 : f32 to vector<16x256xf32>
    %c0_i32_43 = arith.constant 0 : i32
    %c2_i32_44 = arith.constant 2 : i32
    %191 = arith.addi %c0_i32_43, %c2_i32_44 : i32
    %c1_i32_45 = arith.constant 1 : i32
    %192:2 = scf.for %arg8 = %c0_i32_43 to %191 step %c1_i32_45 iter_args(%arg9 = %189, %arg10 = %190) -> (vector<16x256xf32>, vector<16x256xf32>)  : i32 {
      %c0_51 = arith.constant 0 : index
      %209 = arith.index_cast %arg8 : i32 to index
      %210 = memref.load %arg1[%c0_51, %209] : memref<7x2xf32, #tpu.memory_space<smem>>
      %c0_52 = arith.constant 0 : index
      %211 = arith.index_cast %arg8 : i32 to index
      %212 = memref.load %arg2[%c0_52, %211] : memref<7x2xf32, #tpu.memory_space<smem>>
      %213 = vector.broadcast %212 : f32 to vector<1x256xf32>
      %214 = arith.mulf %49, %213 : vector<1x256xf32>
      %215 = vector.broadcast %210 : f32 to vector<16x256xf32>
      %216 = arith.mulf %215, %arg9 : vector<16x256xf32>
      %217 = vector.broadcast %214 : vector<1x256xf32> to vector<16x256xf32>
      %218 = arith.mulf %217, %arg10 : vector<16x256xf32>
      %219 = arith.addf %216, %218 : vector<16x256xf32>
      %220 = vector.broadcast %210 : f32 to vector<16x256xf32>
      %221 = arith.mulf %220, %arg10 : vector<16x256xf32>
      %222 = vector.broadcast %214 : vector<1x256xf32> to vector<16x256xf32>
      %223 = arith.mulf %222, %arg9 : vector<16x256xf32>
      %224 = arith.subf %221, %223 : vector<16x256xf32>
      %c1 = arith.constant 1 : index
      %225 = arith.index_cast %arg8 : i32 to index
      %226 = memref.load %arg1[%c1, %225] : memref<7x2xf32, #tpu.memory_space<smem>>
      %c1_53 = arith.constant 1 : index
      %227 = arith.index_cast %arg8 : i32 to index
      %228 = memref.load %arg2[%c1_53, %227] : memref<7x2xf32, #tpu.memory_space<smem>>
      %229 = vector.broadcast %228 : f32 to vector<1x256xf32>
      %230 = arith.mulf %58, %229 : vector<1x256xf32>
      %231 = vector.broadcast %226 : f32 to vector<16x256xf32>
      %232 = arith.mulf %231, %219 : vector<16x256xf32>
      %233 = vector.broadcast %230 : vector<1x256xf32> to vector<16x256xf32>
      %234 = arith.mulf %233, %224 : vector<16x256xf32>
      %235 = arith.addf %232, %234 : vector<16x256xf32>
      %236 = vector.broadcast %226 : f32 to vector<16x256xf32>
      %237 = arith.mulf %236, %224 : vector<16x256xf32>
      %238 = vector.broadcast %230 : vector<1x256xf32> to vector<16x256xf32>
      %239 = arith.mulf %238, %219 : vector<16x256xf32>
      %240 = arith.subf %237, %239 : vector<16x256xf32>
      %c2 = arith.constant 2 : index
      %241 = arith.index_cast %arg8 : i32 to index
      %242 = memref.load %arg1[%c2, %241] : memref<7x2xf32, #tpu.memory_space<smem>>
      %c2_54 = arith.constant 2 : index
      %243 = arith.index_cast %arg8 : i32 to index
      %244 = memref.load %arg2[%c2_54, %243] : memref<7x2xf32, #tpu.memory_space<smem>>
      %245 = vector.broadcast %244 : f32 to vector<1x256xf32>
      %246 = arith.mulf %67, %245 : vector<1x256xf32>
      %247 = vector.broadcast %242 : f32 to vector<16x256xf32>
      %248 = arith.mulf %247, %235 : vector<16x256xf32>
      %249 = vector.broadcast %246 : vector<1x256xf32> to vector<16x256xf32>
      %250 = arith.mulf %249, %240 : vector<16x256xf32>
      %251 = arith.addf %248, %250 : vector<16x256xf32>
      %252 = vector.broadcast %242 : f32 to vector<16x256xf32>
      %253 = arith.mulf %252, %240 : vector<16x256xf32>
      %254 = vector.broadcast %246 : vector<1x256xf32> to vector<16x256xf32>
      %255 = arith.mulf %254, %235 : vector<16x256xf32>
      %256 = arith.subf %253, %255 : vector<16x256xf32>
      %c3 = arith.constant 3 : index
      %257 = arith.index_cast %arg8 : i32 to index
      %258 = memref.load %arg1[%c3, %257] : memref<7x2xf32, #tpu.memory_space<smem>>
      %c3_55 = arith.constant 3 : index
      %259 = arith.index_cast %arg8 : i32 to index
      %260 = memref.load %arg2[%c3_55, %259] : memref<7x2xf32, #tpu.memory_space<smem>>
      %261 = vector.broadcast %260 : f32 to vector<1x256xf32>
      %262 = arith.mulf %76, %261 : vector<1x256xf32>
      %263 = vector.broadcast %258 : f32 to vector<16x256xf32>
      %264 = arith.mulf %263, %251 : vector<16x256xf32>
      %265 = vector.broadcast %262 : vector<1x256xf32> to vector<16x256xf32>
      %266 = arith.mulf %265, %256 : vector<16x256xf32>
      %267 = arith.addf %264, %266 : vector<16x256xf32>
      %268 = vector.broadcast %258 : f32 to vector<16x256xf32>
      %269 = arith.mulf %268, %256 : vector<16x256xf32>
      %270 = vector.broadcast %262 : vector<1x256xf32> to vector<16x256xf32>
      %271 = arith.mulf %270, %251 : vector<16x256xf32>
      %272 = arith.subf %269, %271 : vector<16x256xf32>
      %c4 = arith.constant 4 : index
      %273 = arith.index_cast %arg8 : i32 to index
      %274 = memref.load %arg1[%c4, %273] : memref<7x2xf32, #tpu.memory_space<smem>>
      %c4_56 = arith.constant 4 : index
      %275 = arith.index_cast %arg8 : i32 to index
      %276 = memref.load %arg2[%c4_56, %275] : memref<7x2xf32, #tpu.memory_space<smem>>
      %277 = vector.broadcast %276 : f32 to vector<1x256xf32>
      %278 = arith.mulf %85, %277 : vector<1x256xf32>
      %279 = vector.broadcast %274 : f32 to vector<16x256xf32>
      %280 = arith.mulf %279, %267 : vector<16x256xf32>
      %281 = vector.broadcast %278 : vector<1x256xf32> to vector<16x256xf32>
      %282 = arith.mulf %281, %272 : vector<16x256xf32>
      %283 = arith.addf %280, %282 : vector<16x256xf32>
      %284 = vector.broadcast %274 : f32 to vector<16x256xf32>
      %285 = arith.mulf %284, %272 : vector<16x256xf32>
      %286 = vector.broadcast %278 : vector<1x256xf32> to vector<16x256xf32>
      %287 = arith.mulf %286, %267 : vector<16x256xf32>
      %288 = arith.subf %285, %287 : vector<16x256xf32>
      %c5 = arith.constant 5 : index
      %289 = arith.index_cast %arg8 : i32 to index
      %290 = memref.load %arg1[%c5, %289] : memref<7x2xf32, #tpu.memory_space<smem>>
      %c5_57 = arith.constant 5 : index
      %291 = arith.index_cast %arg8 : i32 to index
      %292 = memref.load %arg2[%c5_57, %291] : memref<7x2xf32, #tpu.memory_space<smem>>
      %293 = vector.broadcast %292 : f32 to vector<1x256xf32>
      %294 = arith.mulf %94, %293 : vector<1x256xf32>
      %295 = vector.broadcast %290 : f32 to vector<16x256xf32>
      %296 = arith.mulf %295, %283 : vector<16x256xf32>
      %297 = vector.broadcast %294 : vector<1x256xf32> to vector<16x256xf32>
      %298 = arith.mulf %297, %288 : vector<16x256xf32>
      %299 = arith.addf %296, %298 : vector<16x256xf32>
      %300 = vector.broadcast %290 : f32 to vector<16x256xf32>
      %301 = arith.mulf %300, %288 : vector<16x256xf32>
      %302 = vector.broadcast %294 : vector<1x256xf32> to vector<16x256xf32>
      %303 = arith.mulf %302, %283 : vector<16x256xf32>
      %304 = arith.subf %301, %303 : vector<16x256xf32>
      %c6 = arith.constant 6 : index
      %305 = arith.index_cast %arg8 : i32 to index
      %306 = memref.load %arg1[%c6, %305] : memref<7x2xf32, #tpu.memory_space<smem>>
      %c6_58 = arith.constant 6 : index
      %307 = arith.index_cast %arg8 : i32 to index
      %308 = memref.load %arg2[%c6_58, %307] : memref<7x2xf32, #tpu.memory_space<smem>>
      %309 = vector.broadcast %308 : f32 to vector<1x256xf32>
      %310 = arith.mulf %103, %309 : vector<1x256xf32>
      %311 = vector.broadcast %306 : f32 to vector<16x256xf32>
      %312 = arith.mulf %311, %299 : vector<16x256xf32>
      %313 = vector.broadcast %310 : vector<1x256xf32> to vector<16x256xf32>
      %314 = arith.mulf %313, %304 : vector<16x256xf32>
      %315 = arith.addf %312, %314 : vector<16x256xf32>
      %316 = vector.broadcast %306 : f32 to vector<16x256xf32>
      %317 = arith.mulf %316, %304 : vector<16x256xf32>
      %318 = vector.broadcast %310 : vector<1x256xf32> to vector<16x256xf32>
      %319 = arith.mulf %318, %299 : vector<16x256xf32>
      %320 = arith.subf %317, %319 : vector<16x256xf32>
      %c0_59 = arith.constant 0 : index
      %321 = arith.index_cast %arg8 : i32 to index
      %322 = memref.load %arg3[%c0_59, %321] : memref<8x2xf32, #tpu.memory_space<smem>>
      %c0_60 = arith.constant 0 : index
      %323 = arith.index_cast %arg8 : i32 to index
      %324 = memref.load %arg4[%c0_60, %323] : memref<8x2xf32, #tpu.memory_space<smem>>
      %c128_i32 = arith.constant 128 : i32
      %325 = tpu.dynamic_rotate %315 by %c128_i32 dim 1 : vector<16x256xf32>, i32 -> vector<16x256xf32>
      %c128_i32_61 = arith.constant 128 : i32
      %326 = tpu.dynamic_rotate %315 by %c128_i32_61 dim 1 : vector<16x256xf32>, i32 -> vector<16x256xf32>
      %327 = arith.subf %326, %325 : vector<16x256xf32>
      %328 = vector.broadcast %5 : vector<1x256xf32> to vector<16x256xf32>
      %329 = arith.mulf %328, %327 : vector<16x256xf32>
      %330 = arith.addf %325, %329 : vector<16x256xf32>
      %c128_i32_62 = arith.constant 128 : i32
      %331 = tpu.dynamic_rotate %320 by %c128_i32_62 dim 1 : vector<16x256xf32>, i32 -> vector<16x256xf32>
      %c128_i32_63 = arith.constant 128 : i32
      %332 = tpu.dynamic_rotate %320 by %c128_i32_63 dim 1 : vector<16x256xf32>, i32 -> vector<16x256xf32>
      %333 = arith.subf %332, %331 : vector<16x256xf32>
      %334 = vector.broadcast %5 : vector<1x256xf32> to vector<16x256xf32>
      %335 = arith.mulf %334, %333 : vector<16x256xf32>
      %336 = arith.addf %331, %335 : vector<16x256xf32>
      %337 = vector.broadcast %322 : f32 to vector<16x256xf32>
      %338 = arith.mulf %337, %315 : vector<16x256xf32>
      %339 = vector.broadcast %324 : f32 to vector<16x256xf32>
      %340 = arith.mulf %339, %336 : vector<16x256xf32>
      %341 = arith.addf %338, %340 : vector<16x256xf32>
      %342 = vector.broadcast %322 : f32 to vector<16x256xf32>
      %343 = arith.mulf %342, %320 : vector<16x256xf32>
      %344 = vector.broadcast %324 : f32 to vector<16x256xf32>
      %345 = arith.mulf %344, %330 : vector<16x256xf32>
      %346 = arith.subf %343, %345 : vector<16x256xf32>
      %c1_64 = arith.constant 1 : index
      %347 = arith.index_cast %arg8 : i32 to index
      %348 = memref.load %arg3[%c1_64, %347] : memref<8x2xf32, #tpu.memory_space<smem>>
      %c1_65 = arith.constant 1 : index
      %349 = arith.index_cast %arg8 : i32 to index
      %350 = memref.load %arg4[%c1_65, %349] : memref<8x2xf32, #tpu.memory_space<smem>>
      %c192_i32 = arith.constant 192 : i32
      %351 = tpu.dynamic_rotate %341 by %c192_i32 dim 1 : vector<16x256xf32>, i32 -> vector<16x256xf32>
      %c64_i32 = arith.constant 64 : i32
      %352 = tpu.dynamic_rotate %341 by %c64_i32 dim 1 : vector<16x256xf32>, i32 -> vector<16x256xf32>
      %353 = arith.subf %352, %351 : vector<16x256xf32>
      %354 = vector.broadcast %10 : vector<1x256xf32> to vector<16x256xf32>
      %355 = arith.mulf %354, %353 : vector<16x256xf32>
      %356 = arith.addf %351, %355 : vector<16x256xf32>
      %c192_i32_66 = arith.constant 192 : i32
      %357 = tpu.dynamic_rotate %346 by %c192_i32_66 dim 1 : vector<16x256xf32>, i32 -> vector<16x256xf32>
      %c64_i32_67 = arith.constant 64 : i32
      %358 = tpu.dynamic_rotate %346 by %c64_i32_67 dim 1 : vector<16x256xf32>, i32 -> vector<16x256xf32>
      %359 = arith.subf %358, %357 : vector<16x256xf32>
      %360 = vector.broadcast %10 : vector<1x256xf32> to vector<16x256xf32>
      %361 = arith.mulf %360, %359 : vector<16x256xf32>
      %362 = arith.addf %357, %361 : vector<16x256xf32>
      %363 = vector.broadcast %348 : f32 to vector<16x256xf32>
      %364 = arith.mulf %363, %341 : vector<16x256xf32>
      %365 = vector.broadcast %350 : f32 to vector<16x256xf32>
      %366 = arith.mulf %365, %362 : vector<16x256xf32>
      %367 = arith.addf %364, %366 : vector<16x256xf32>
      %368 = vector.broadcast %348 : f32 to vector<16x256xf32>
      %369 = arith.mulf %368, %346 : vector<16x256xf32>
      %370 = vector.broadcast %350 : f32 to vector<16x256xf32>
      %371 = arith.mulf %370, %356 : vector<16x256xf32>
      %372 = arith.subf %369, %371 : vector<16x256xf32>
      %c2_68 = arith.constant 2 : index
      %373 = arith.index_cast %arg8 : i32 to index
      %374 = memref.load %arg3[%c2_68, %373] : memref<8x2xf32, #tpu.memory_space<smem>>
      %c2_69 = arith.constant 2 : index
      %375 = arith.index_cast %arg8 : i32 to index
      %376 = memref.load %arg4[%c2_69, %375] : memref<8x2xf32, #tpu.memory_space<smem>>
      %c224_i32 = arith.constant 224 : i32
      %377 = tpu.dynamic_rotate %367 by %c224_i32 dim 1 : vector<16x256xf32>, i32 -> vector<16x256xf32>
      %c32_i32 = arith.constant 32 : i32
      %378 = tpu.dynamic_rotate %367 by %c32_i32 dim 1 : vector<16x256xf32>, i32 -> vector<16x256xf32>
      %379 = arith.subf %378, %377 : vector<16x256xf32>
      %380 = vector.broadcast %15 : vector<1x256xf32> to vector<16x256xf32>
      %381 = arith.mulf %380, %379 : vector<16x256xf32>
      %382 = arith.addf %377, %381 : vector<16x256xf32>
      %c224_i32_70 = arith.constant 224 : i32
      %383 = tpu.dynamic_rotate %372 by %c224_i32_70 dim 1 : vector<16x256xf32>, i32 -> vector<16x256xf32>
      %c32_i32_71 = arith.constant 32 : i32
      %384 = tpu.dynamic_rotate %372 by %c32_i32_71 dim 1 : vector<16x256xf32>, i32 -> vector<16x256xf32>
      %385 = arith.subf %384, %383 : vector<16x256xf32>
      %386 = vector.broadcast %15 : vector<1x256xf32> to vector<16x256xf32>
      %387 = arith.mulf %386, %385 : vector<16x256xf32>
      %388 = arith.addf %383, %387 : vector<16x256xf32>
      %389 = vector.broadcast %374 : f32 to vector<16x256xf32>
      %390 = arith.mulf %389, %367 : vector<16x256xf32>
      %391 = vector.broadcast %376 : f32 to vector<16x256xf32>
      %392 = arith.mulf %391, %388 : vector<16x256xf32>
      %393 = arith.addf %390, %392 : vector<16x256xf32>
      %394 = vector.broadcast %374 : f32 to vector<16x256xf32>
      %395 = arith.mulf %394, %372 : vector<16x256xf32>
      %396 = vector.broadcast %376 : f32 to vector<16x256xf32>
      %397 = arith.mulf %396, %382 : vector<16x256xf32>
      %398 = arith.subf %395, %397 : vector<16x256xf32>
      %c3_72 = arith.constant 3 : index
      %399 = arith.index_cast %arg8 : i32 to index
      %400 = memref.load %arg3[%c3_72, %399] : memref<8x2xf32, #tpu.memory_space<smem>>
      %c3_73 = arith.constant 3 : index
      %401 = arith.index_cast %arg8 : i32 to index
      %402 = memref.load %arg4[%c3_73, %401] : memref<8x2xf32, #tpu.memory_space<smem>>
      %c240_i32 = arith.constant 240 : i32
      %403 = tpu.dynamic_rotate %393 by %c240_i32 dim 1 : vector<16x256xf32>, i32 -> vector<16x256xf32>
      %c16_i32 = arith.constant 16 : i32
      %404 = tpu.dynamic_rotate %393 by %c16_i32 dim 1 : vector<16x256xf32>, i32 -> vector<16x256xf32>
      %405 = arith.subf %404, %403 : vector<16x256xf32>
      %406 = vector.broadcast %20 : vector<1x256xf32> to vector<16x256xf32>
      %407 = arith.mulf %406, %405 : vector<16x256xf32>
      %408 = arith.addf %403, %407 : vector<16x256xf32>
      %c240_i32_74 = arith.constant 240 : i32
      %409 = tpu.dynamic_rotate %398 by %c240_i32_74 dim 1 : vector<16x256xf32>, i32 -> vector<16x256xf32>
      %c16_i32_75 = arith.constant 16 : i32
      %410 = tpu.dynamic_rotate %398 by %c16_i32_75 dim 1 : vector<16x256xf32>, i32 -> vector<16x256xf32>
      %411 = arith.subf %410, %409 : vector<16x256xf32>
      %412 = vector.broadcast %20 : vector<1x256xf32> to vector<16x256xf32>
      %413 = arith.mulf %412, %411 : vector<16x256xf32>
      %414 = arith.addf %409, %413 : vector<16x256xf32>
      %415 = vector.broadcast %400 : f32 to vector<16x256xf32>
      %416 = arith.mulf %415, %393 : vector<16x256xf32>
      %417 = vector.broadcast %402 : f32 to vector<16x256xf32>
      %418 = arith.mulf %417, %414 : vector<16x256xf32>
      %419 = arith.addf %416, %418 : vector<16x256xf32>
      %420 = vector.broadcast %400 : f32 to vector<16x256xf32>
      %421 = arith.mulf %420, %398 : vector<16x256xf32>
      %422 = vector.broadcast %402 : f32 to vector<16x256xf32>
      %423 = arith.mulf %422, %408 : vector<16x256xf32>
      %424 = arith.subf %421, %423 : vector<16x256xf32>
      %c4_76 = arith.constant 4 : index
      %425 = arith.index_cast %arg8 : i32 to index
      %426 = memref.load %arg3[%c4_76, %425] : memref<8x2xf32, #tpu.memory_space<smem>>
      %c4_77 = arith.constant 4 : index
      %427 = arith.index_cast %arg8 : i32 to index
      %428 = memref.load %arg4[%c4_77, %427] : memref<8x2xf32, #tpu.memory_space<smem>>
      %c248_i32 = arith.constant 248 : i32
      %429 = tpu.dynamic_rotate %419 by %c248_i32 dim 1 : vector<16x256xf32>, i32 -> vector<16x256xf32>
      %c8_i32 = arith.constant 8 : i32
      %430 = tpu.dynamic_rotate %419 by %c8_i32 dim 1 : vector<16x256xf32>, i32 -> vector<16x256xf32>
      %431 = arith.subf %430, %429 : vector<16x256xf32>
      %432 = vector.broadcast %25 : vector<1x256xf32> to vector<16x256xf32>
      %433 = arith.mulf %432, %431 : vector<16x256xf32>
      %434 = arith.addf %429, %433 : vector<16x256xf32>
      %c248_i32_78 = arith.constant 248 : i32
      %435 = tpu.dynamic_rotate %424 by %c248_i32_78 dim 1 : vector<16x256xf32>, i32 -> vector<16x256xf32>
      %c8_i32_79 = arith.constant 8 : i32
      %436 = tpu.dynamic_rotate %424 by %c8_i32_79 dim 1 : vector<16x256xf32>, i32 -> vector<16x256xf32>
      %437 = arith.subf %436, %435 : vector<16x256xf32>
      %438 = vector.broadcast %25 : vector<1x256xf32> to vector<16x256xf32>
      %439 = arith.mulf %438, %437 : vector<16x256xf32>
      %440 = arith.addf %435, %439 : vector<16x256xf32>
      %441 = vector.broadcast %426 : f32 to vector<16x256xf32>
      %442 = arith.mulf %441, %419 : vector<16x256xf32>
      %443 = vector.broadcast %428 : f32 to vector<16x256xf32>
      %444 = arith.mulf %443, %440 : vector<16x256xf32>
      %445 = arith.addf %442, %444 : vector<16x256xf32>
      %446 = vector.broadcast %426 : f32 to vector<16x256xf32>
      %447 = arith.mulf %446, %424 : vector<16x256xf32>
      %448 = vector.broadcast %428 : f32 to vector<16x256xf32>
      %449 = arith.mulf %448, %434 : vector<16x256xf32>
      %450 = arith.subf %447, %449 : vector<16x256xf32>
      %c5_80 = arith.constant 5 : index
      %451 = arith.index_cast %arg8 : i32 to index
      %452 = memref.load %arg3[%c5_80, %451] : memref<8x2xf32, #tpu.memory_space<smem>>
      %c5_81 = arith.constant 5 : index
      %453 = arith.index_cast %arg8 : i32 to index
      %454 = memref.load %arg4[%c5_81, %453] : memref<8x2xf32, #tpu.memory_space<smem>>
      %c252_i32 = arith.constant 252 : i32
      %455 = tpu.dynamic_rotate %445 by %c252_i32 dim 1 : vector<16x256xf32>, i32 -> vector<16x256xf32>
      %c4_i32_82 = arith.constant 4 : i32
      %456 = tpu.dynamic_rotate %445 by %c4_i32_82 dim 1 : vector<16x256xf32>, i32 -> vector<16x256xf32>
      %457 = arith.subf %456, %455 : vector<16x256xf32>
      %458 = vector.broadcast %30 : vector<1x256xf32> to vector<16x256xf32>
      %459 = arith.mulf %458, %457 : vector<16x256xf32>
      %460 = arith.addf %455, %459 : vector<16x256xf32>
      %c252_i32_83 = arith.constant 252 : i32
      %461 = tpu.dynamic_rotate %450 by %c252_i32_83 dim 1 : vector<16x256xf32>, i32 -> vector<16x256xf32>
      %c4_i32_84 = arith.constant 4 : i32
      %462 = tpu.dynamic_rotate %450 by %c4_i32_84 dim 1 : vector<16x256xf32>, i32 -> vector<16x256xf32>
      %463 = arith.subf %462, %461 : vector<16x256xf32>
      %464 = vector.broadcast %30 : vector<1x256xf32> to vector<16x256xf32>
      %465 = arith.mulf %464, %463 : vector<16x256xf32>
      %466 = arith.addf %461, %465 : vector<16x256xf32>
      %467 = vector.broadcast %452 : f32 to vector<16x256xf32>
      %468 = arith.mulf %467, %445 : vector<16x256xf32>
      %469 = vector.broadcast %454 : f32 to vector<16x256xf32>
      %470 = arith.mulf %469, %466 : vector<16x256xf32>
      %471 = arith.addf %468, %470 : vector<16x256xf32>
      %472 = vector.broadcast %452 : f32 to vector<16x256xf32>
      %473 = arith.mulf %472, %450 : vector<16x256xf32>
      %474 = vector.broadcast %454 : f32 to vector<16x256xf32>
      %475 = arith.mulf %474, %460 : vector<16x256xf32>
      %476 = arith.subf %473, %475 : vector<16x256xf32>
      %c6_85 = arith.constant 6 : index
      %477 = arith.index_cast %arg8 : i32 to index
      %478 = memref.load %arg3[%c6_85, %477] : memref<8x2xf32, #tpu.memory_space<smem>>
      %c6_86 = arith.constant 6 : index
      %479 = arith.index_cast %arg8 : i32 to index
      %480 = memref.load %arg4[%c6_86, %479] : memref<8x2xf32, #tpu.memory_space<smem>>
      %c254_i32 = arith.constant 254 : i32
      %481 = tpu.dynamic_rotate %471 by %c254_i32 dim 1 : vector<16x256xf32>, i32 -> vector<16x256xf32>
      %c2_i32_87 = arith.constant 2 : i32
      %482 = tpu.dynamic_rotate %471 by %c2_i32_87 dim 1 : vector<16x256xf32>, i32 -> vector<16x256xf32>
      %483 = arith.subf %482, %481 : vector<16x256xf32>
      %484 = vector.broadcast %35 : vector<1x256xf32> to vector<16x256xf32>
      %485 = arith.mulf %484, %483 : vector<16x256xf32>
      %486 = arith.addf %481, %485 : vector<16x256xf32>
      %c254_i32_88 = arith.constant 254 : i32
      %487 = tpu.dynamic_rotate %476 by %c254_i32_88 dim 1 : vector<16x256xf32>, i32 -> vector<16x256xf32>
      %c2_i32_89 = arith.constant 2 : i32
      %488 = tpu.dynamic_rotate %476 by %c2_i32_89 dim 1 : vector<16x256xf32>, i32 -> vector<16x256xf32>
      %489 = arith.subf %488, %487 : vector<16x256xf32>
      %490 = vector.broadcast %35 : vector<1x256xf32> to vector<16x256xf32>
      %491 = arith.mulf %490, %489 : vector<16x256xf32>
      %492 = arith.addf %487, %491 : vector<16x256xf32>
      %493 = vector.broadcast %478 : f32 to vector<16x256xf32>
      %494 = arith.mulf %493, %471 : vector<16x256xf32>
      %495 = vector.broadcast %480 : f32 to vector<16x256xf32>
      %496 = arith.mulf %495, %492 : vector<16x256xf32>
      %497 = arith.addf %494, %496 : vector<16x256xf32>
      %498 = vector.broadcast %478 : f32 to vector<16x256xf32>
      %499 = arith.mulf %498, %476 : vector<16x256xf32>
      %500 = vector.broadcast %480 : f32 to vector<16x256xf32>
      %501 = arith.mulf %500, %486 : vector<16x256xf32>
      %502 = arith.subf %499, %501 : vector<16x256xf32>
      %c7 = arith.constant 7 : index
      %503 = arith.index_cast %arg8 : i32 to index
      %504 = memref.load %arg3[%c7, %503] : memref<8x2xf32, #tpu.memory_space<smem>>
      %c7_90 = arith.constant 7 : index
      %505 = arith.index_cast %arg8 : i32 to index
      %506 = memref.load %arg4[%c7_90, %505] : memref<8x2xf32, #tpu.memory_space<smem>>
      %c255_i32 = arith.constant 255 : i32
      %507 = tpu.dynamic_rotate %497 by %c255_i32 dim 1 : vector<16x256xf32>, i32 -> vector<16x256xf32>
      %c1_i32_91 = arith.constant 1 : i32
      %508 = tpu.dynamic_rotate %497 by %c1_i32_91 dim 1 : vector<16x256xf32>, i32 -> vector<16x256xf32>
      %509 = arith.subf %508, %507 : vector<16x256xf32>
      %510 = vector.broadcast %40 : vector<1x256xf32> to vector<16x256xf32>
      %511 = arith.mulf %510, %509 : vector<16x256xf32>
      %512 = arith.addf %507, %511 : vector<16x256xf32>
      %c255_i32_92 = arith.constant 255 : i32
      %513 = tpu.dynamic_rotate %502 by %c255_i32_92 dim 1 : vector<16x256xf32>, i32 -> vector<16x256xf32>
      %c1_i32_93 = arith.constant 1 : i32
      %514 = tpu.dynamic_rotate %502 by %c1_i32_93 dim 1 : vector<16x256xf32>, i32 -> vector<16x256xf32>
      %515 = arith.subf %514, %513 : vector<16x256xf32>
      %516 = vector.broadcast %40 : vector<1x256xf32> to vector<16x256xf32>
      %517 = arith.mulf %516, %515 : vector<16x256xf32>
      %518 = arith.addf %513, %517 : vector<16x256xf32>
      %519 = vector.broadcast %504 : f32 to vector<16x256xf32>
      %520 = arith.mulf %519, %497 : vector<16x256xf32>
      %521 = vector.broadcast %506 : f32 to vector<16x256xf32>
      %522 = arith.mulf %521, %518 : vector<16x256xf32>
      %523 = arith.addf %520, %522 : vector<16x256xf32>
      %524 = vector.broadcast %504 : f32 to vector<16x256xf32>
      %525 = arith.mulf %524, %502 : vector<16x256xf32>
      %526 = vector.broadcast %506 : f32 to vector<16x256xf32>
      %527 = arith.mulf %526, %512 : vector<16x256xf32>
      %528 = arith.subf %525, %527 : vector<16x256xf32>
      scf.yield %523, %528 : vector<16x256xf32>, vector<16x256xf32>
    }
    %c2_i32_46 = arith.constant 2 : i32
    %193 = vector.extract_strided_slice %192#0 {offsets = [0, 0], sizes = [8, 256], strides = [1, 1]} : vector<16x256xf32> to vector<8x256xf32>
    %194 = vector.extract_strided_slice %192#1 {offsets = [0, 0], sizes = [8, 256], strides = [1, 1]} : vector<16x256xf32> to vector<8x256xf32>
    %195 = vector.extract_strided_slice %192#0 {offsets = [8, 0], sizes = [8, 256], strides = [1, 1]} : vector<16x256xf32> to vector<8x256xf32>
    %196 = vector.extract_strided_slice %192#1 {offsets = [8, 0], sizes = [8, 256], strides = [1, 1]} : vector<16x256xf32> to vector<8x256xf32>
    %197 = arith.mulf %195, %193 : vector<8x256xf32>
    %198 = arith.mulf %196, %194 : vector<8x256xf32>
    %199 = arith.addf %197, %198 : vector<8x256xf32>
    %cst_47 = arith.constant dense<0.000000e+00> : vector<8xf32>
    %200 = vector.multi_reduction <add>, %199, %cst_47 [1] : vector<8x256xf32> to vector<8xf32>
    %201 = vector.shape_cast %200 : vector<8xf32> to vector<8x1xf32>
    %202 = arith.mulf %195, %194 : vector<8x256xf32>
    %203 = arith.mulf %196, %193 : vector<8x256xf32>
    %204 = arith.subf %202, %203 : vector<8x256xf32>
    %cst_48 = arith.constant dense<0.000000e+00> : vector<8xf32>
    %205 = vector.multi_reduction <add>, %204, %cst_48 [1] : vector<8x256xf32> to vector<8xf32>
    %206 = vector.shape_cast %205 : vector<8xf32> to vector<8x1xf32>
    %207 = tpu.concatenate %201, %206 in 1 : vector<8x1xf32>, vector<8x1xf32> -> vector<8x2xf32>
    %c0_49 = arith.constant 0 : index
    %c0_50 = arith.constant 0 : index
    %208 = vector.load %arg7[%c0_49, %c0_50] : memref<8x2xf32, #tpu.memory_space<vmem>>, vector<8x2xf32>
    tpu.vector_store %arg7[%c0_49, %c0_50], %207 {strides = array<i32>} : memref<8x2xf32, #tpu.memory_space<vmem>>, vector<8x2xf32>,
    return
  }
  func.func @transform_0(%arg0: i32) -> (i32, i32) {
    %c0_i32 = arith.constant 0 : i32
    %c0_i32_0 = arith.constant 0 : i32
    %c0_i32_1 = arith.constant 0 : i32
    return %c0_i32, %c0_i32_0 : i32, i32
  }
  func.func @transform_1(%arg0: i32) -> (i32, i32) {
    %c0_i32 = arith.constant 0 : i32
    %c0_i32_0 = arith.constant 0 : i32
    %c0_i32_1 = arith.constant 0 : i32
    return %c0_i32, %c0_i32_0 : i32, i32
  }
  func.func @transform_2(%arg0: i32) -> (i32, i32) {
    %c0_i32 = arith.constant 0 : i32
    %c0_i32_0 = arith.constant 0 : i32
    %c0_i32_1 = arith.constant 0 : i32
    return %c0_i32, %c0_i32_0 : i32, i32
  }
  func.func @transform_3(%arg0: i32) -> (i32, i32) {
    %c0_i32 = arith.constant 0 : i32
    %c0_i32_0 = arith.constant 0 : i32
    %c0_i32_1 = arith.constant 0 : i32
    return %c0_i32, %c0_i32_0 : i32, i32
  }
  func.func @transform_4(%arg0: i32) -> (i32, i32) {
    %c0_i32 = arith.constant 0 : i32
    %c0_i32_0 = arith.constant 0 : i32
    return %arg0, %c0_i32 : i32, i32
  }
  func.func @transform_5(%arg0: i32) -> (i32, i32) {
    %c0_i32 = arith.constant 0 : i32
    %c0_i32_0 = arith.constant 0 : i32
    return %arg0, %c0_i32 : i32, i32
  }
  func.func @transform_6(%arg0: i32) -> (i32, i32) {
    %c0_i32 = arith.constant 0 : i32
    %c0_i32_0 = arith.constant 0 : i32
    return %arg0, %c0_i32 : i32, i32
  }
}

</mosaic_0001>

<llo_original>
// kernel: tpu_custom_call.1
$region0: #{tpu_custom_call.1}
  #allocation0 [shape = 'u32[]', space=smem, size = 0x4, offset = 0x4, fixed_abs, tag = 'smem constant byte address 0x4 - core index']
  #allocation1 [shape = 'u32[144,128]{1,0:T(1,128)}', space=vmem, size = 0x12000, scoped, tag = 'internal scratch']
  %s0 = inlined_call_operand.vmem [shape: f32[7,2], index: 0, kind: input, shape index: {}]
  %s1 = inlined_call_operand.vmem [shape: f32[7,2], index: 1, kind: input, shape index: {}]
  %s2 = inlined_call_operand.vmem [shape: f32[8,2], index: 2, kind: input, shape index: {}]
  %s3 = inlined_call_operand.vmem [shape: f32[8,2], index: 3, kind: input, shape index: {}]
  %s4 = inlined_call_operand.vmem [shape: f32[8,8], index: 4, kind: input, shape index: {}]
  %s5 = inlined_call_operand.vmem [shape: f32[8,8], index: 5, kind: input, shape index: {}]
  %s6 = inlined_call_operand.vmem [shape: f32[8,2], index: 6, kind: output, shape index: {}]
  %s7 = sld [smem:[#allocation0]]
  $region57: #{tpu_custom_call.1} parent=0
    _
  %s9 = ssub.s32 1, %s7
  %s10 = scalar_select 0, %s9, %s7
  $region1: #{tpu_custom_call.1} parent=0
    #allocation2 [shape = 'u8[4096]{0}', space=smem, size = 0x1000, scoped, tag = 'input window, operand 0, single buffered']
    #allocation3 [shape = 's32[1]{0}', space=sflag, size = 0x4, scoped, tag = 'scoped memory for tpu_custom_call.1']
    #allocation4 [shape = 'u8[4096]{0}', space=smem, size = 0x1000, scoped, tag = 'input window, operand 1, single buffered']
    #allocation5 [shape = 's32[1]{0}', space=sflag, size = 0x4, scoped, tag = 'scoped memory for tpu_custom_call.1']
    #allocation6 [shape = 'u8[4096]{0}', space=smem, size = 0x1000, scoped, tag = 'input window, operand 2, single buffered']
    #allocation7 [shape = 'u8[4096]{0}', space=smem, size = 0x1000, scoped, tag = 'input window, operand 3, single buffered']
    #allocation8 [shape = 's32[1]{0}', space=sflag, size = 0x4, scoped, tag = 'scoped memory for tpu_custom_call.1']
    %11 = vsyncpa [#allocation3], 0
    %12 = vsyncpa [#allocation5], 0
    %13 = vsyncpa [#allocation8], 0
    // Predicated region
    $region2: #{tpu_custom_call.1} parent=1 // pred_check
      _
    $region3: #{tpu_custom_call.1} parent=1 // pred_check_branch
      %15 = sbr.rel (0) target = $region5
    $region4: #{tpu_custom_call.1} parent=1 // pred_region
      %s17 = ssub.s32 128, 128
      %18 = vsyncadd [#allocation3], %s17
      %s20 = sshll.u32 %s0, 4
      %s21 = int_to_ptr.vmem [resolvable:$true] %s20
      %23 = dma.vmem_to_smem %s21, 128, [#allocation2], [#allocation3]
    $region5: #{tpu_custom_call.1} parent=1 // pred_fallthru
      _
    // Predicated region
    $region6: #{tpu_custom_call.1} parent=1 // pred_check
      _
    $region7: #{tpu_custom_call.1} parent=1 // pred_check_branch
      %25 = sbr.rel (0) target = $region9
    $region8: #{tpu_custom_call.1} parent=1 // pred_region
      %s27 = ssub.s32 128, 128
      %28 = vsyncadd [#allocation5], %s27
      %s30 = sshll.u32 %s1, 4
      %s31 = int_to_ptr.vmem [resolvable:$true] %s30
      %33 = dma.vmem_to_smem %s31, 128, [#allocation4], [#allocation5]
    $region9: #{tpu_custom_call.1} parent=1 // pred_fallthru
      _
    // Predicated region
    $region10: #{tpu_custom_call.1} parent=1 // pred_check
      _
    $region11: #{tpu_custom_call.1} parent=1 // pred_check_branch
      %35 = sbr.rel (0) target = $region13
    $region12: #{tpu_custom_call.1} parent=1 // pred_region
      %s37 = ssub.s32 128, 128
      %38 = vsyncadd [#allocation5], %s37
      %s40 = sshll.u32 %s2, 4
      %s41 = int_to_ptr.vmem [resolvable:$true] %s40
      %43 = dma.vmem_to_smem %s41, 128, [#allocation6], [#allocation5]
    $region13: #{tpu_custom_call.1} parent=1 // pred_fallthru
      _
    // Predicated region
    $region14: #{tpu_custom_call.1} parent=1 // pred_check
      _
    $region15: #{tpu_custom_call.1} parent=1 // pred_check_branch
      %45 = sbr.rel (0) target = $region17
    $region16: #{tpu_custom_call.1} parent=1 // pred_region
      %s47 = ssub.s32 128, 128
      %48 = vsyncadd [#allocation8], %s47
      %s50 = sshll.u32 %s3, 4
      %s51 = int_to_ptr.vmem [resolvable:$true] %s50
      %53 = dma.vmem_to_smem %s51, 128, [#allocation7], [#allocation8]
    $region17: #{tpu_custom_call.1} parent=1 // pred_fallthru
      _
    // Predicated region
    $region18: #{tpu_custom_call.1} parent=1 // pred_check
      _
    $region19: #{tpu_custom_call.1} parent=1 // pred_check_branch
      %55 = sbr.rel (0) target = $region21
    $region20: #{tpu_custom_call.1} parent=1 // pred_region
      _
    $region21: #{tpu_custom_call.1} parent=1 // pred_fallthru
      _
    // Predicated region
    $region22: #{tpu_custom_call.1} parent=1 // pred_check
      _
    $region23: #{tpu_custom_call.1} parent=1 // pred_check_branch
      %57 = sbr.rel (0) target = $region25
    $region24: #{tpu_custom_call.1} parent=1 // pred_region
      _
    $region25: #{tpu_custom_call.1} parent=1 // pred_fallthru
      _
    // Predicated region
    $region26: #{tpu_custom_call.1} parent=1 // pred_check
      _
    $region27: #{tpu_custom_call.1} parent=1 // pred_check_branch
      %59 = sbr.rel (0) target = $region29
    $region28: #{tpu_custom_call.1} parent=1 // pred_region
      %60 = dma.done [#allocation3], 128
    $region29: #{tpu_custom_call.1} parent=1 // pred_fallthru
      _
    // Predicated region
    $region30: #{tpu_custom_call.1} parent=1 // pred_check
      _
    $region31: #{tpu_custom_call.1} parent=1 // pred_check_branch
      %62 = sbr.rel (0) target = $region33
    $region32: #{tpu_custom_call.1} parent=1 // pred_region
      %63 = dma.done [#allocation5], 128
    $region33: #{tpu_custom_call.1} parent=1 // pred_fallthru
      _
    // Predicated region
    $region34: #{tpu_custom_call.1} parent=1 // pred_check
      _
    $region35: #{tpu_custom_call.1} parent=1 // pred_check_branch
      %65 = sbr.rel (0) target = $region37
    $region36: #{tpu_custom_call.1} parent=1 // pred_region
      %66 = dma.done [#allocation5], 128
    $region37: #{tpu_custom_call.1} parent=1 // pred_fallthru
      _
    // Predicated region
    $region38: #{tpu_custom_call.1} parent=1 // pred_check
      _
    $region39: #{tpu_custom_call.1} parent=1 // pred_check_branch
      %68 = sbr.rel (0) target = $region41
    $region40: #{tpu_custom_call.1} parent=1 // pred_region
      %69 = dma.done [#allocation8], 128
    $region41: #{tpu_custom_call.1} parent=1 // pred_fallthru
      _
    %70 = sfence
    %v71 = vlaneseq
    %v72 = vand.u32 %v71, 127
    %v73 = vadd.s32 %v72, 128
    %v74 = vshra.s32 %v72, 7
    %v75 = vshra.s32 %v73, 7
    %v76 = vand.u32 %v74, 1
    %v77 = vand.u32 %v75, 1
    %v78 = vcvt.s32.f32 %v76
    %v79 = vcvt.s32.f32 %v77
    %v80 = vshra.s32 %v72, 6
    %v81 = vshra.s32 %v73, 6
    %v82 = vand.u32 %v80, 1
    %v83 = vand.u32 %v81, 1
    %v84 = vcvt.s32.f32 %v82
    %v85 = vcvt.s32.f32 %v83
    %v86 = vshra.s32 %v72, 5
    %v87 = vshra.s32 %v73, 5
    %v88 = vand.u32 %v86, 1
    %v89 = vand.u32 %v87, 1
    %v90 = vcvt.s32.f32 %v88
    %v91 = vcvt.s32.f32 %v89
    %v92 = vshra.s32 %v72, 4
    %v93 = vshra.s32 %v73, 4
    %v94 = vand.u32 %v92, 1
    %v95 = vand.u32 %v93, 1
    %v96 = vcvt.s32.f32 %v94
    %v97 = vcvt.s32.f32 %v95
    %v98 = vshra.s32 %v72, 3
    %v99 = vshra.s32 %v73, 3
    %v100 = vand.u32 %v98, 1
    %v101 = vand.u32 %v99, 1
    %v102 = vcvt.s32.f32 %v100
    %v103 = vcvt.s32.f32 %v101
    %v104 = vshra.s32 %v72, 2
    %v105 = vshra.s32 %v73, 2
    %v106 = vand.u32 %v104, 1
    %v107 = vand.u32 %v105, 1
    %v108 = vcvt.s32.f32 %v106
    %v109 = vcvt.s32.f32 %v107
    %v110 = vshra.s32 %v72, 1
    %v111 = vshra.s32 %v73, 1
    %v112 = vand.u32 %v110, 1
    %v113 = vand.u32 %v111, 1
    %v114 = vcvt.s32.f32 %v112
    %v115 = vcvt.s32.f32 %v113
    %v116 = vand.u32 %v72, 1
    %v117 = vand.u32 %v73, 1
    %v118 = vcvt.s32.f32 %v116
    %v119 = vcvt.s32.f32 %v117
    %v120 = vmul.f32 %v78, 2.0
    %v121 = vmul.f32 %v79, 2.0
    %v122 = vsub.f32 1.0, %v120
    %v123 = vsub.f32 1.0, %v121
    %v124 = vmul.f32 %v84, 2.0
    %v125 = vmul.f32 %v85, 2.0
    %v126 = vsub.f32 1.0, %v124
    %v127 = vsub.f32 1.0, %v125
    %v128 = vmul.f32 %v122, %v126
    %v129 = vmul.f32 %v123, %v127
    %v130 = vmul.f32 %v90, 2.0
    %v131 = vmul.f32 %v91, 2.0
    %v132 = vsub.f32 1.0, %v130
    %v133 = vsub.f32 1.0, %v131
    %v134 = vmul.f32 %v126, %v132
    %v135 = vmul.f32 %v127, %v133
    %v136 = vmul.f32 %v96, 2.0
    %v137 = vmul.f32 %v97, 2.0
    %v138 = vsub.f32 1.0, %v136
    %v139 = vsub.f32 1.0, %v137
    %v140 = vmul.f32 %v132, %v138
    %v141 = vmul.f32 %v133, %v139
    %v142 = vmul.f32 %v102, 2.0
    %v143 = vmul.f32 %v103, 2.0
    %v144 = vsub.f32 1.0, %v142
    %v145 = vsub.f32 1.0, %v143
    %v146 = vmul.f32 %v138, %v144
    %v147 = vmul.f32 %v139, %v145
    %v148 = vmul.f32 %v108, 2.0
    %v149 = vmul.f32 %v109, 2.0
    %v150 = vsub.f32 1.0, %v148
    %v151 = vsub.f32 1.0, %v149
    %v152 = vmul.f32 %v144, %v150
    %v153 = vmul.f32 %v145, %v151
    %v154 = vmul.f32 %v114, 2.0
    %v155 = vmul.f32 %v115, 2.0
    %v156 = vsub.f32 1.0, %v154
    %v157 = vsub.f32 1.0, %v155
    %v158 = vmul.f32 %v150, %v156
    %v159 = vmul.f32 %v151, %v157
    %v160 = vmul.f32 %v118, 2.0
    %v161 = vmul.f32 %v119, 2.0
    %v162 = vsub.f32 1.0, %v160
    %v163 = vsub.f32 1.0, %v161
    %v164 = vmul.f32 %v156, %v162
    %v165 = vmul.f32 %v157, %v163
    %v166 = vld [vmem:[%s4] sm:$0xff]
    %v167 = vld [vmem:[%s5] sm:$0xff]
    %v168 = vmul.f32 %v166, 0.5
    %v169 = vmul.f32 %v167, 0.5
    %v170 = vand.u32 2147483647, %v168
    %vm171 = vcmp.le.f32.partialorder %v170, 0.7853982
    %vm172 = vcmp.lt.s32.totalorder %v168, 0
    %v173 = vand.u32 %v168, 2139095040
    %v174 = vshrl.u32 %v173, 23
    %v175 = vsub.s32 %v174, 127
    %v176 = vand.u32 2147483647, %v168
    %v177 = vand.u32 %v176, 8388607
    %v178 = vor.u32 %v177, 8388608
    %v179 = vsub.s32 0, %v178
    %v180 = vadd.s32 %v175, 1
    %vm181 = vcmp.gt.s32.totalorder %v180, 0
    %v182 = vsel %vm181, %v180, 0
    %v183 = vshrl.u32 %v182, 5
    %v184 = vand.u32 %v182, 31
    %v185 = vsub.s32 32, %v184
    %v186 = vshrl.u32 683565275, %v185
    %v187 = vshll.u32 683565275, %v184
    %v188 = vshrl.u32 2475754826, %v185
    %v189 = vor.u32 %v187, %v188
    %v190 = vshll.u32 2475754826, %v184
    %v191 = vshrl.u32 2131351028, %v185
    %v192 = vor.u32 %v190, %v191
    %v193 = vshll.u32 2131351028, %v184
    %v194 = vshrl.u32 2102212464, %v185
    %v195 = vor.u32 %v193, %v194
    %v196 = vshll.u32 2102212464, %v184
    %v197 = vshrl.u32 920167782, %v185
    %v198 = vor.u32 %v196, %v197
    %v199 = vshll.u32 920167782, %v184
    %v200 = vshrl.u32 1326507024, %v185
    %v201 = vor.u32 %v199, %v200
    %vm202 = vcmp.lt.s32.totalorder %v183, 1
    %vm203 = vcmp.lt.s32.totalorder %v183, 2
    %vm204 = vcmp.lt.s32.totalorder %v183, 3
    %vm205 = vcmp.lt.s32.totalorder %v183, 4
    %v206 = vsel %vm202, %v186, %v189
    %v207 = vsel %vm205, %v195, 2102212464
    %v208 = vsel %vm204, %v192, %v207
    %v209 = vsel %vm203, %v206, %v208
    %v210 = vsel %vm202, %v189, %v192
    %v211 = vsel %vm205, %v198, 920167782
    %v212 = vsel %vm204, %v195, %v211
    %v213 = vsel %vm203, %v210, %v212
    %v214 = vsel %vm202, %v192, %v195
    %v215 = vsel %vm205, %v201, 1326507024
    %v216 = vsel %vm204, %v198, %v215
    %v217 = vsel %vm203, %v214, %v216
    %v218 = vshll.u32 %v178, 8
    %v219 = vmul.u32.u64.compose %v218, %v217
    %v220 = vextract.low.u32 %v219
    %v221 = vextract.high.u32 %v219
    %v222 = vmul.u32.u64.compose %v218, %v213
    %v223 = vextract.low.u32 %v222
    %v224 = vextract.high.u32 %v222
    %v225 = vmul.u32 %v218, %v209
    %v226 = vadd.s32 %v221, %v223
    %vm227 = vc.u32 %v221, %v223
    %v228 = vadd.s32 %v224, 1
    %v229 = vsel %vm227, %v228, %v224
    %v230 = vadd.s32 %v225, %v229
    %v231 = vadd.s32 %v230, 536870912
    %v232 = vshrl.u32 %v231, 30
    %v233 = vshll.u32 %v232, 30
    %v234 = vsub.s32 %v230, %v233
    %vm235 = vcmp.lt.s32.totalorder %v234, 0
    %v236 = vsub.s32 0, %v234
    %v237 = vsel %vm235, %v236, %v234
    %v238 = vclz %v237
    %v239 = vsub.s32 %v238, 2
    %vm240 = vcmp.gt.s32.totalorder 0, %v239
    %v241 = vsel %vm240, 0, %v239
    %v242 = vsub.s32 32, %v241
    %v243 = vshll.u32 %v234, %v241
    %v244 = vshrl.u32 %v226, %v242
    %v245 = vor.u32 %v243, %v244
    %v246 = vsub.s32 4294967266, %v241
    %v247 = vadd.s32 %v246, 127
    %v248 = vshll.u32 %v247, 23
    %v249 = vor.u32 4788187, %v248
    %v250 = vand.u32 2147483647, %v249
    %v252 = vcvt.s32.f32 %v245
    %v253 = vmul.f32 %v252, %v250
    %v254 = vxor.u32 %v253, 2147483648
    %v255 = vsel %vm172, %v254, %v253
    %v256 = vsub.s32 4, %v232
    %v257 = vsel %vm172, %v256, %v232
    %v258 = vsel %vm171, %v168, %v255
    %v259 = vsel %vm171, 0, %v257
    %v260 = vcosq.f32.pop %v258
    %v261 = vsinq.f32.pop %v258
    %vm262 = vweird.f32 %v168
    %v263 = vand.u32 %v259, 3
    %vm264 = vcmp.lt.s32.totalorder %v263, 2
    %vm265 = vcmp.eq.s32.totalorder %v263, 0
    %v266 = vxor.u32 %v261, 2147483648
    %v267 = vsel %vm265, %v260, %v266
    %vm268 = vcmp.eq.s32.totalorder %v263, 2
    %v269 = vxor.u32 %v260, 2147483648
    %v270 = vsel %vm268, %v269, %v261
    %v271 = vsel %vm264, %v267, %v270
    %v272 = vsel %vm262, nan, %v271
    %v273 = vand.u32 2147483647, %v169
    %vm274 = vcmp.le.f32.partialorder %v273, 0.7853982
    %vm275 = vcmp.lt.s32.totalorder %v169, 0
    %v276 = vand.u32 %v169, 2139095040
    %v277 = vshrl.u32 %v276, 23
    %v278 = vsub.s32 %v277, 127
    %v279 = vand.u32 2147483647, %v169
    %v280 = vand.u32 %v279, 8388607
    %v281 = vor.u32 %v280, 8388608
    %v282 = vsub.s32 0, %v281
    %v283 = vadd.s32 %v278, 1
    %vm284 = vcmp.gt.s32.totalorder %v283, 0
    %v285 = vsel %vm284, %v283, 0
    %v286 = vshrl.u32 %v285, 5
    %v287 = vand.u32 %v285, 31
    %v288 = vsub.s32 32, %v287
    %v289 = vshrl.u32 683565275, %v288
    %v290 = vshll.u32 683565275, %v287
    %v291 = vshrl.u32 2475754826, %v288
    %v292 = vor.u32 %v290, %v291
    %v293 = vshll.u32 2475754826, %v287
    %v294 = vshrl.u32 2131351028, %v288
    %v295 = vor.u32 %v293, %v294
    %v296 = vshll.u32 2131351028, %v287
    %v297 = vshrl.u32 2102212464, %v288
    %v298 = vor.u32 %v296, %v297
    %v299 = vshll.u32 2102212464, %v287
    %v300 = vshrl.u32 920167782, %v288
    %v301 = vor.u32 %v299, %v300
    %v302 = vshll.u32 920167782, %v287
    %v303 = vshrl.u32 1326507024, %v288
    %v304 = vor.u32 %v302, %v303
    %vm305 = vcmp.lt.s32.totalorder %v286, 1
    %vm306 = vcmp.lt.s32.totalorder %v286, 2
    %vm307 = vcmp.lt.s32.totalorder %v286, 3
    %vm308 = vcmp.lt.s32.totalorder %v286, 4
    %v309 = vsel %vm305, %v289, %v292
    %v310 = vsel %vm308, %v298, 2102212464
    %v311 = vsel %vm307, %v295, %v310
    %v312 = vsel %vm306, %v309, %v311
    %v313 = vsel %vm305, %v292, %v295
    %v314 = vsel %vm308, %v301, 920167782
    %v315 = vsel %vm307, %v298, %v314
    %v316 = vsel %vm306, %v313, %v315
    %v317 = vsel %vm305, %v295, %v298
    %v318 = vsel %vm308, %v304, 1326507024
    %v319 = vsel %vm307, %v301, %v318
    %v320 = vsel %vm306, %v317, %v319
    %v321 = vshll.u32 %v281, 8
    %v322 = vmul.u32.u64.compose %v321, %v320
    %v323 = vextract.low.u32 %v322
    %v324 = vextract.high.u32 %v322
    %v325 = vmul.u32.u64.compose %v321, %v316
    %v326 = vextract.low.u32 %v325
    %v327 = vextract.high.u32 %v325
    %v328 = vmul.u32 %v321, %v312
    %v329 = vadd.s32 %v324, %v326
    %vm330 = vc.u32 %v324, %v326
    %v331 = vadd.s32 %v327, 1
    %v332 = vsel %vm330, %v331, %v327
    %v333 = vadd.s32 %v328, %v332
    %v334 = vadd.s32 %v333, 536870912
    %v335 = vshrl.u32 %v334, 30
    %v336 = vshll.u32 %v335, 30
    %v337 = vsub.s32 %v333, %v336
    %vm338 = vcmp.lt.s32.totalorder %v337, 0
    %v339 = vsub.s32 0, %v337
    %v340 = vsel %vm338, %v339, %v337
    %v341 = vclz %v340
    %v342 = vsub.s32 %v341, 2
    %vm343 = vcmp.gt.s32.totalorder 0, %v342
    %v344 = vsel %vm343, 0, %v342
    %v345 = vsub.s32 32, %v344
    %v346 = vshll.u32 %v337, %v344
    %v347 = vshrl.u32 %v329, %v345
    %v348 = vor.u32 %v346, %v347
    %v349 = vsub.s32 4294967266, %v344
    %v350 = vadd.s32 %v349, 127
    %v351 = vshll.u32 %v350, 23
    %v352 = vor.u32 4788187, %v351
    %v353 = vand.u32 2147483647, %v352
    %v355 = vcvt.s32.f32 %v348
    %v356 = vmul.f32 %v355, %v353
    %v357 = vxor.u32 %v356, 2147483648
    %v358 = vsel %vm275, %v357, %v356
    %v359 = vsub.s32 4, %v335
    %v360 = vsel %vm275, %v359, %v335
    %v361 = vsel %vm274, %v169, %v358
    %v362 = vsel %vm274, 0, %v360
    %v363 = vcosq.f32.pop %v361
    %v364 = vsinq.f32.pop %v361
    %vm365 = vweird.f32 %v169
    %v366 = vand.u32 %v362, 3
    %vm367 = vcmp.lt.s32.totalorder %v366, 2
    %vm368 = vcmp.eq.s32.totalorder %v366, 0
    %v369 = vxor.u32 %v364, 2147483648
    %v370 = vsel %vm368, %v363, %v369
    %vm371 = vcmp.eq.s32.totalorder %v366, 2
    %v372 = vxor.u32 %v363, 2147483648
    %v373 = vsel %vm371, %v372, %v364
    %v374 = vsel %vm367, %v370, %v373
    %v375 = vsel %vm365, nan, %v374
    %v376 = vand.u32 2147483647, %v168
    %vm377 = vcmp.le.f32.partialorder %v376, 0.7853982
    %vm378 = vcmp.lt.s32.totalorder %v168, 0
    %v379 = vand.u32 %v168, 2139095040
    %v380 = vshrl.u32 %v379, 23
    %v381 = vsub.s32 %v380, 127
    %v382 = vand.u32 2147483647, %v168
    %v383 = vand.u32 %v382, 8388607
    %v384 = vor.u32 %v383, 8388608
    %v385 = vsub.s32 0, %v384
    %v386 = vadd.s32 %v381, 1
    %vm387 = vcmp.gt.s32.totalorder %v386, 0
    %v388 = vsel %vm387, %v386, 0
    %v389 = vshrl.u32 %v388, 5
    %v390 = vand.u32 %v388, 31
    %v391 = vsub.s32 32, %v390
    %v392 = vshrl.u32 683565275, %v391
    %v393 = vshll.u32 683565275, %v390
    %v394 = vshrl.u32 2475754826, %v391
    %v395 = vor.u32 %v393, %v394
    %v396 = vshll.u32 2475754826, %v390
    %v397 = vshrl.u32 2131351028, %v391
    %v398 = vor.u32 %v396, %v397
    %v399 = vshll.u32 2131351028, %v390
    %v400 = vshrl.u32 2102212464, %v391
    %v401 = vor.u32 %v399, %v400
    %v402 = vshll.u32 2102212464, %v390
    %v403 = vshrl.u32 920167782, %v391
    %v404 = vor.u32 %v402, %v403
    %v405 = vshll.u32 920167782, %v390
    %v406 = vshrl.u32 1326507024, %v391
    %v407 = vor.u32 %v405, %v406
    %vm408 = vcmp.lt.s32.totalorder %v389, 1
    %vm409 = vcmp.lt.s32.totalorder %v389, 2
    %vm410 = vcmp.lt.s32.totalorder %v389, 3
    %vm411 = vcmp.lt.s32.totalorder %v389, 4
    %v412 = vsel %vm408, %v392, %v395
    %v413 = vsel %vm411, %v401, 2102212464
    %v414 = vsel %vm410, %v398, %v413
    %v415 = vsel %vm409, %v412, %v414
    %v416 = vsel %vm408, %v395, %v398
    %v417 = vsel %vm411, %v404, 920167782
    %v418 = vsel %vm410, %v401, %v417
    %v419 = vsel %vm409, %v416, %v418
    %v420 = vsel %vm408, %v398, %v401
    %v421 = vsel %vm411, %v407, 1326507024
    %v422 = vsel %vm410, %v404, %v421
    %v423 = vsel %vm409, %v420, %v422
    %v424 = vshll.u32 %v384, 8
    %v425 = vmul.u32.u64.compose %v424, %v423
    %v426 = vextract.low.u32 %v425
    %v427 = vextract.high.u32 %v425
    %v428 = vmul.u32.u64.compose %v424, %v419
    %v429 = vextract.low.u32 %v428
    %v430 = vextract.high.u32 %v428
    %v431 = vmul.u32 %v424, %v415
    %v432 = vadd.s32 %v427, %v429
    %vm433 = vc.u32 %v427, %v429
    %v434 = vadd.s32 %v430, 1
    %v435 = vsel %vm433, %v434, %v430
    %v436 = vadd.s32 %v431, %v435
    %v437 = vadd.s32 %v436, 536870912
    %v438 = vshrl.u32 %v437, 30
    %v439 = vshll.u32 %v438, 30
    %v440 = vsub.s32 %v436, %v439
    %vm441 = vcmp.lt.s32.totalorder %v440, 0
    %v442 = vsub.s32 0, %v440
    %v443 = vsel %vm441, %v442, %v440
    %v444 = vclz %v443
    %v445 = vsub.s32 %v444, 2
    %vm446 = vcmp.gt.s32.totalorder 0, %v445
    %v447 = vsel %vm446, 0, %v445
    %v448 = vsub.s32 32, %v447
    %v449 = vshll.u32 %v440, %v447
    %v450 = vshrl.u32 %v432, %v448
    %v451 = vor.u32 %v449, %v450
    %v452 = vsub.s32 4294967266, %v447
    %v453 = vadd.s32 %v452, 127
    %v454 = vshll.u32 %v453, 23
    %v455 = vor.u32 4788187, %v454
    %v456 = vand.u32 2147483647, %v455
    %v458 = vcvt.s32.f32 %v451
    %v459 = vmul.f32 %v458, %v456
    %v460 = vxor.u32 %v459, 2147483648
    %v461 = vsel %vm378, %v460, %v459
    %v462 = vsub.s32 4, %v438
    %v463 = vsel %vm378, %v462, %v438
    %v464 = vsel %vm377, %v168, %v461
    %v465 = vsel %vm377, 0, %v463
    %v466 = vcosq.f32.pop %v464
    %v467 = vsinq.f32.pop %v464
    %vm468 = vweird.f32 %v168
    %v469 = vadd.s32 %v465, 3
    %v470 = vand.u32 %v469, 3
    %vm471 = vcmp.lt.s32.totalorder %v470, 2
    %vm472 = vcmp.eq.s32.totalorder %v470, 0
    %v473 = vxor.u32 %v467, 2147483648
    %v474 = vsel %vm472, %v466, %v473
    %vm475 = vcmp.eq.s32.totalorder %v470, 2
    %v476 = vxor.u32 %v466, 2147483648
    %v477 = vsel %vm475, %v476, %v467
    %v478 = vsel %vm471, %v474, %v477
    %v479 = vsel %vm468, nan, %v478
    %v480 = vand.u32 2147483647, %v169
    %vm481 = vcmp.le.f32.partialorder %v480, 0.7853982
    %vm482 = vcmp.lt.s32.totalorder %v169, 0
    %v483 = vand.u32 %v169, 2139095040
    %v484 = vshrl.u32 %v483, 23
    %v485 = vsub.s32 %v484, 127
    %v486 = vand.u32 2147483647, %v169
    %v487 = vand.u32 %v486, 8388607
    %v488 = vor.u32 %v487, 8388608
    %v489 = vsub.s32 0, %v488
    %v490 = vadd.s32 %v485, 1
    %vm491 = vcmp.gt.s32.totalorder %v490, 0
    %v492 = vsel %vm491, %v490, 0
    %v493 = vshrl.u32 %v492, 5
    %v494 = vand.u32 %v492, 31
    %v495 = vsub.s32 32, %v494
    %v496 = vshrl.u32 683565275, %v495
    %v497 = vshll.u32 683565275, %v494
    %v498 = vshrl.u32 2475754826, %v495
    %v499 = vor.u32 %v497, %v498
    %v500 = vshll.u32 2475754826, %v494
    %v501 = vshrl.u32 2131351028, %v495
    %v502 = vor.u32 %v500, %v501
    %v503 = vshll.u32 2131351028, %v494
    %v504 = vshrl.u32 2102212464, %v495
    %v505 = vor.u32 %v503, %v504
    %v506 = vshll.u32 2102212464, %v494
    %v507 = vshrl.u32 920167782, %v495
    %v508 = vor.u32 %v506, %v507
    %v509 = vshll.u32 920167782, %v494
    %v510 = vshrl.u32 1326507024, %v495
    %v511 = vor.u32 %v509, %v510
    %vm512 = vcmp.lt.s32.totalorder %v493, 1
    %vm513 = vcmp.lt.s32.totalorder %v493, 2
    %vm514 = vcmp.lt.s32.totalorder %v493, 3
    %vm515 = vcmp.lt.s32.totalorder %v493, 4
    %v516 = vsel %vm512, %v496, %v499
    %v517 = vsel %vm515, %v505, 2102212464
    %v518 = vsel %vm514, %v502, %v517
    %v519 = vsel %vm513, %v516, %v518
    %v520 = vsel %vm512, %v499, %v502
    %v521 = vsel %vm515, %v508, 920167782
    %v522 = vsel %vm514, %v505, %v521
    %v523 = vsel %vm513, %v520, %v522
    %v524 = vsel %vm512, %v502, %v505
    %v525 = vsel %vm515, %v511, 1326507024
    %v526 = vsel %vm514, %v508, %v525
    %v527 = vsel %vm513, %v524, %v526
    %v528 = vshll.u32 %v488, 8
    %v529 = vmul.u32.u64.compose %v528, %v527
    %v530 = vextract.low.u32 %v529
    %v531 = vextract.high.u32 %v529
    %v532 = vmul.u32.u64.compose %v528, %v523
    %v533 = vextract.low.u32 %v532
    %v534 = vextract.high.u32 %v532
    %v535 = vmul.u32 %v528, %v519
    %v536 = vadd.s32 %v531, %v533
    %vm537 = vc.u32 %v531, %v533
    %v538 = vadd.s32 %v534, 1
    %v539 = vsel %vm537, %v538, %v534
    %v540 = vadd.s32 %v535, %v539
    %v541 = vadd.s32 %v540, 536870912
    %v542 = vshrl.u32 %v541, 30
    %v543 = vshll.u32 %v542, 30
    %v544 = vsub.s32 %v540, %v543
    %vm545 = vcmp.lt.s32.totalorder %v544, 0
    %v546 = vsub.s32 0, %v544
    %v547 = vsel %vm545, %v546, %v544
    %v548 = vclz %v547
    %v549 = vsub.s32 %v548, 2
    %vm550 = vcmp.gt.s32.totalorder 0, %v549
    %v551 = vsel %vm550, 0, %v549
    %v552 = vsub.s32 32, %v551
    %v553 = vshll.u32 %v544, %v551
    %v554 = vshrl.u32 %v536, %v552
    %v555 = vor.u32 %v553, %v554
    %v556 = vsub.s32 4294967266, %v551
    %v557 = vadd.s32 %v556, 127
    %v558 = vshll.u32 %v557, 23
    %v559 = vor.u32 4788187, %v558
    %v560 = vand.u32 2147483647, %v559
    %v562 = vcvt.s32.f32 %v555
    %v563 = vmul.f32 %v562, %v560
    %v564 = vxor.u32 %v563, 2147483648
    %v565 = vsel %vm482, %v564, %v563
    %v566 = vsub.s32 4, %v542
    %v567 = vsel %vm482, %v566, %v542
    %v568 = vsel %vm481, %v169, %v565
    %v569 = vsel %vm481, 0, %v567
    %v570 = vcosq.f32.pop %v568
    %v571 = vsinq.f32.pop %v568
    %vm572 = vweird.f32 %v169
    %v573 = vadd.s32 %v569, 3
    %v574 = vand.u32 %v573, 3
    %vm575 = vcmp.lt.s32.totalorder %v574, 2
    %vm576 = vcmp.eq.s32.totalorder %v574, 0
    %v577 = vxor.u32 %v571, 2147483648
    %v578 = vsel %vm576, %v570, %v577
    %vm579 = vcmp.eq.s32.totalorder %v574, 2
    %v580 = vxor.u32 %v570, 2147483648
    %v581 = vsel %vm579, %v580, %v571
    %v582 = vsel %vm575, %v578, %v581
    %v583 = vsel %vm572, nan, %v582
    %v584 = vsub.f32 %v272, %v479
    %v585 = vsub.f32 %v375, %v583
    %v586 = vmul.f32 %v584, 0.70710677
    %v587 = vmul.f32 %v585, 0.70710677
    %v588 = vadd.f32 %v272, %v479
    %v589 = vadd.f32 %v375, %v583
    %v590 = vmul.f32 %v588, 0.70710677
    %v591 = vmul.f32 %v589, 0.70710677
    %v592 = vsub.f32 %v590, %v586
    %v593 = vsub.f32 %v591, %v587
    %595 = vset.pattern.permute.xlu0 0
    %596 = vperm.xlu0 %595, %v592
    %v597 = vpop.permute.xlu0 %596
    %600 = vset.pattern.permute.xlu0 0
    %601 = vperm.xlu0 %600, %v593
    %v602 = vpop.permute.xlu0 %601
    %v604 = vmul.f32 %v597, %v78
    %v605 = vmul.f32 %v597, %v79
    %v606 = vmul.f32 %v602, %v78
    %v607 = vmul.f32 %v602, %v79
    %609 = vset.pattern.permute.xlu0 0
    %610 = vperm.xlu0 %609, %v586
    %v611 = vpop.permute.xlu0 %610
    %614 = vset.pattern.permute.xlu0 0
    %615 = vperm.xlu0 %614, %v587
    %v616 = vpop.permute.xlu0 %615
    %v618 = vadd.f32 %v611, %v604
    %v619 = vadd.f32 %v611, %v605
    %v620 = vadd.f32 %v616, %v606
    %v621 = vadd.f32 %v616, %v607
    %622 = vset.pattern.permute.xlu0 1
    %623 = vperm.xlu0 %622, %v592
    %v624 = vpop.permute.xlu0 %623
    %626 = vset.pattern.permute.xlu0 1
    %627 = vperm.xlu0 %626, %v593
    %v628 = vpop.permute.xlu0 %627
    %v630 = vmul.f32 %v624, %v84
    %v631 = vmul.f32 %v624, %v85
    %v632 = vmul.f32 %v628, %v84
    %v633 = vmul.f32 %v628, %v85
    %634 = vset.pattern.permute.xlu0 1
    %635 = vperm.xlu0 %634, %v586
    %v636 = vpop.permute.xlu0 %635
    %638 = vset.pattern.permute.xlu0 1
    %639 = vperm.xlu0 %638, %v587
    %v640 = vpop.permute.xlu0 %639
    %v642 = vadd.f32 %v636, %v630
    %v643 = vadd.f32 %v636, %v631
    %v644 = vadd.f32 %v640, %v632
    %v645 = vadd.f32 %v640, %v633
    %v646 = vmul.f32 %v618, %v642
    %v647 = vmul.f32 %v619, %v643
    %v648 = vmul.f32 %v620, %v644
    %v649 = vmul.f32 %v621, %v645
    %650 = vset.pattern.permute.xlu0 2
    %651 = vperm.xlu0 %650, %v592
    %v652 = vpop.permute.xlu0 %651
    %654 = vset.pattern.permute.xlu0 2
    %655 = vperm.xlu0 %654, %v593
    %v656 = vpop.permute.xlu0 %655
    %v658 = vmul.f32 %v652, %v90
    %v659 = vmul.f32 %v652, %v91
    %v660 = vmul.f32 %v656, %v90
    %v661 = vmul.f32 %v656, %v91
    %662 = vset.pattern.permute.xlu0 2
    %663 = vperm.xlu0 %662, %v586
    %v664 = vpop.permute.xlu0 %663
    %666 = vset.pattern.permute.xlu0 2
    %667 = vperm.xlu0 %666, %v587
    %v668 = vpop.permute.xlu0 %667
    %v670 = vadd.f32 %v664, %v658
    %v671 = vadd.f32 %v664, %v659
    %v672 = vadd.f32 %v668, %v660
    %v673 = vadd.f32 %v668, %v661
    %v674 = vmul.f32 %v646, %v670
    %v675 = vmul.f32 %v647, %v671
    %v676 = vmul.f32 %v648, %v672
    %v677 = vmul.f32 %v649, %v673
    %678 = vset.pattern.permute.xlu0 3
    %679 = vperm.xlu0 %678, %v592
    %v680 = vpop.permute.xlu0 %679
    %682 = vset.pattern.permute.xlu0 3
    %683 = vperm.xlu0 %682, %v593
    %v684 = vpop.permute.xlu0 %683
    %v686 = vmul.f32 %v680, %v96
    %v687 = vmul.f32 %v680, %v97
    %v688 = vmul.f32 %v684, %v96
    %v689 = vmul.f32 %v684, %v97
    %690 = vset.pattern.permute.xlu0 3
    %691 = vperm.xlu0 %690, %v586
    %v692 = vpop.permute.xlu0 %691
    %694 = vset.pattern.permute.xlu0 3
    %695 = vperm.xlu0 %694, %v587
    %v696 = vpop.permute.xlu0 %695
    %v698 = vadd.f32 %v692, %v686
    %v699 = vadd.f32 %v692, %v687
    %v700 = vadd.f32 %v696, %v688
    %v701 = vadd.f32 %v696, %v689
    %v702 = vmul.f32 %v674, %v698
    %v703 = vmul.f32 %v675, %v699
    %v704 = vmul.f32 %v676, %v700
    %v705 = vmul.f32 %v677, %v701
    %706 = vset.pattern.permute.xlu0 4
    %707 = vperm.xlu0 %706, %v592
    %v708 = vpop.permute.xlu0 %707
    %710 = vset.pattern.permute.xlu0 4
    %711 = vperm.xlu0 %710, %v593
    %v712 = vpop.permute.xlu0 %711
    %v714 = vmul.f32 %v708, %v102
    %v715 = vmul.f32 %v708, %v103
    %v716 = vmul.f32 %v712, %v102
    %v717 = vmul.f32 %v712, %v103
    %718 = vset.pattern.permute.xlu0 4
    %719 = vperm.xlu0 %718, %v586
    %v720 = vpop.permute.xlu0 %719
    %722 = vset.pattern.permute.xlu0 4
    %723 = vperm.xlu0 %722, %v587
    %v724 = vpop.permute.xlu0 %723
    %v726 = vadd.f32 %v720, %v714
    %v727 = vadd.f32 %v720, %v715
    %v728 = vadd.f32 %v724, %v716
    %v729 = vadd.f32 %v724, %v717
    %v730 = vmul.f32 %v702, %v726
    %v731 = vmul.f32 %v703, %v727
    %v732 = vmul.f32 %v704, %v728
    %v733 = vmul.f32 %v705, %v729
    %734 = vset.pattern.permute.xlu0 5
    %735 = vperm.xlu0 %734, %v592
    %v736 = vpop.permute.xlu0 %735
    %738 = vset.pattern.permute.xlu0 5
    %739 = vperm.xlu0 %738, %v593
    %v740 = vpop.permute.xlu0 %739
    %v742 = vmul.f32 %v736, %v108
    %v743 = vmul.f32 %v736, %v109
    %v744 = vmul.f32 %v740, %v108
    %v745 = vmul.f32 %v740, %v109
    %746 = vset.pattern.permute.xlu0 5
    %747 = vperm.xlu0 %746, %v586
    %v748 = vpop.permute.xlu0 %747
    %750 = vset.pattern.permute.xlu0 5
    %751 = vperm.xlu0 %750, %v587
    %v752 = vpop.permute.xlu0 %751
    %v754 = vadd.f32 %v748, %v742
    %v755 = vadd.f32 %v748, %v743
    %v756 = vadd.f32 %v752, %v744
    %v757 = vadd.f32 %v752, %v745
    %v758 = vmul.f32 %v730, %v754
    %v759 = vmul.f32 %v731, %v755
    %v760 = vmul.f32 %v732, %v756
    %v761 = vmul.f32 %v733, %v757
    %762 = vset.pattern.permute.xlu0 6
    %763 = vperm.xlu0 %762, %v592
    %v764 = vpop.permute.xlu0 %763
    %766 = vset.pattern.permute.xlu0 6
    %767 = vperm.xlu0 %766, %v593
    %v768 = vpop.permute.xlu0 %767
    %v770 = vmul.f32 %v764, %v114
    %v771 = vmul.f32 %v764, %v115
    %v772 = vmul.f32 %v768, %v114
    %v773 = vmul.f32 %v768, %v115
    %774 = vset.pattern.permute.xlu0 6
    %775 = vperm.xlu0 %774, %v586
    %v776 = vpop.permute.xlu0 %775
    %778 = vset.pattern.permute.xlu0 6
    %779 = vperm.xlu0 %778, %v587
    %v780 = vpop.permute.xlu0 %779
    %v782 = vadd.f32 %v776, %v770
    %v783 = vadd.f32 %v776, %v771
    %v784 = vadd.f32 %v780, %v772
    %v785 = vadd.f32 %v780, %v773
    %v786 = vmul.f32 %v758, %v782
    %v787 = vmul.f32 %v759, %v783
    %v788 = vmul.f32 %v760, %v784
    %v789 = vmul.f32 %v761, %v785
    %790 = vset.pattern.permute.xlu0 7
    %791 = vperm.xlu0 %790, %v592
    %v792 = vpop.permute.xlu0 %791
    %794 = vset.pattern.permute.xlu0 7
    %795 = vperm.xlu0 %794, %v593
    %v796 = vpop.permute.xlu0 %795
    %v798 = vmul.f32 %v792, %v118
    %v799 = vmul.f32 %v792, %v119
    %v800 = vmul.f32 %v796, %v118
    %v801 = vmul.f32 %v796, %v119
    %802 = vset.pattern.permute.xlu0 7
    %803 = vperm.xlu0 %802, %v586
    %v804 = vpop.permute.xlu0 %803
    %806 = vset.pattern.permute.xlu0 7
    %807 = vperm.xlu0 %806, %v587
    %v808 = vpop.permute.xlu0 %807
    %v810 = vadd.f32 %v804, %v798
    %v811 = vadd.f32 %v804, %v799
    %v812 = vadd.f32 %v808, %v800
    %v813 = vadd.f32 %v808, %v801
    %v814 = vmul.f32 %v786, %v810
    %v815 = vmul.f32 %v787, %v811
    %v816 = vmul.f32 %v788, %v812
    %v817 = vmul.f32 %v789, %v813
    loop: start=0, step=1, limit=2
    $region42: #{tpu_custom_call.1} parent=1 // loop_pre_header
      _
    $region43: #{tpu_custom_call.1} parent=1 // loop_header
      %s819 = sphi 0, %s823
      %p820 = scmp.ge.s32.totalorder %s819, 2
      %v824 = vphi %v814, %v1792
      %v825 = vphi %v815, %v1793
      %v826 = vphi %v816, %v1794
      %v827 = vphi %v817, %v1795
      %v828 = vphi 0.0, %v1804
      %v829 = vphi 0.0, %v1805
      %v830 = vphi 0.0, %v1806
      %v831 = vphi 0.0, %v1807
    $region44: #{tpu_custom_call.1} parent=1 // loop_header_branch
      %822 = sbr.rel (%p820) target = $region48
    $region45: #{tpu_custom_call.1} parent=1 // loop_body
      %s832 = sld [smem:[#allocation2 + %s819]]
      %s833 = sld [smem:[#allocation4 + %s819]]
      %v834 = vstv %s833
      %v835 = vmul.f32 %v128, %v834
      %v836 = vmul.f32 %v129, %v834
      %v837 = vstv %s832
      %v838 = vmul.f32 %v837, %v824
      %v839 = vmul.f32 %v837, %v825
      %v840 = vmul.f32 %v837, %v826
      %v841 = vmul.f32 %v837, %v827
      %v842 = vmul.f32 %v835, %v828
      %v843 = vmul.f32 %v836, %v829
      %v844 = vmul.f32 %v835, %v830
      %v845 = vmul.f32 %v836, %v831
      %v846 = vadd.f32 %v838, %v842
      %v847 = vadd.f32 %v839, %v843
      %v848 = vadd.f32 %v840, %v844
      %v849 = vadd.f32 %v841, %v845
      %v850 = vmul.f32 %v837, %v828
      %v851 = vmul.f32 %v837, %v829
      %v852 = vmul.f32 %v837, %v830
      %v853 = vmul.f32 %v837, %v831
      %v854 = vmul.f32 %v835, %v824
      %v855 = vmul.f32 %v836, %v825
      %v856 = vmul.f32 %v835, %v826
      %v857 = vmul.f32 %v836, %v827
      %v858 = vsub.f32 %v850, %v854
      %v859 = vsub.f32 %v851, %v855
      %v860 = vsub.f32 %v852, %v856
      %v861 = vsub.f32 %v853, %v857
      %s862 = sshra.s32 %s819, 7
      %s863 = sand.u32 %s819, 127
      %s864 = sadd.s32 %s862, 1
      %s865 = smul.u32 %s864, 128
      %s866 = sshra.s32 %s819, 7
      %s867 = sand.u32 %s819, 127
      %s868 = sadd.s32 %s865, %s867
      %s869 = sld [smem:[#allocation2 + %s868]]
      %s870 = sld [smem:[#allocation4 + %s868]]
      %v871 = vstv %s870
      %v872 = vmul.f32 %v134, %v871
      %v873 = vmul.f32 %v135, %v871
      %v874 = vstv %s869
      %v875 = vmul.f32 %v874, %v846
      %v876 = vmul.f32 %v874, %v847
      %v877 = vmul.f32 %v874, %v848
      %v878 = vmul.f32 %v874, %v849
      %v879 = vmul.f32 %v872, %v858
      %v880 = vmul.f32 %v873, %v859
      %v881 = vmul.f32 %v872, %v860
      %v882 = vmul.f32 %v873, %v861
      %v883 = vadd.f32 %v875, %v879
      %v884 = vadd.f32 %v876, %v880
      %v885 = vadd.f32 %v877, %v881
      %v886 = vadd.f32 %v878, %v882
      %v887 = vmul.f32 %v874, %v858
      %v888 = vmul.f32 %v874, %v859
      %v889 = vmul.f32 %v874, %v860
      %v890 = vmul.f32 %v874, %v861
      %v891 = vmul.f32 %v872, %v846
      %v892 = vmul.f32 %v873, %v847
      %v893 = vmul.f32 %v872, %v848
      %v894 = vmul.f32 %v873, %v849
      %v895 = vsub.f32 %v887, %v891
      %v896 = vsub.f32 %v888, %v892
      %v897 = vsub.f32 %v889, %v893
      %v898 = vsub.f32 %v890, %v894
      %s899 = sadd.s32 %s862, 2
      %s900 = smul.u32 %s899, 128
      %s901 = sadd.s32 %s900, %s867
      %s902 = sld [smem:[#allocation2 + %s901]]
      %s903 = sld [smem:[#allocation4 + %s901]]
      %v904 = vstv %s903
      %v905 = vmul.f32 %v140, %v904
      %v906 = vmul.f32 %v141, %v904
      %v907 = vstv %s902
      %v908 = vmul.f32 %v907, %v883
      %v909 = vmul.f32 %v907, %v884
      %v910 = vmul.f32 %v907, %v885
      %v911 = vmul.f32 %v907, %v886
      %v912 = vmul.f32 %v905, %v895
      %v913 = vmul.f32 %v906, %v896
      %v914 = vmul.f32 %v905, %v897
      %v915 = vmul.f32 %v906, %v898
      %v916 = vadd.f32 %v908, %v912
      %v917 = vadd.f32 %v909, %v913
      %v918 = vadd.f32 %v910, %v914
      %v919 = vadd.f32 %v911, %v915
      %v920 = vmul.f32 %v907, %v895
      %v921 = vmul.f32 %v907, %v896
      %v922 = vmul.f32 %v907, %v897
      %v923 = vmul.f32 %v907, %v898
      %v924 = vmul.f32 %v905, %v883
      %v925 = vmul.f32 %v906, %v884
      %v926 = vmul.f32 %v905, %v885
      %v927 = vmul.f32 %v906, %v886
      %v928 = vsub.f32 %v920, %v924
      %v929 = vsub.f32 %v921, %v925
      %v930 = vsub.f32 %v922, %v926
      %v931 = vsub.f32 %v923, %v927
      %s932 = sadd.s32 %s862, 3
      %s933 = smul.u32 %s932, 128
      %s934 = sadd.s32 %s933, %s867
      %s935 = sld [smem:[#allocation2 + %s934]]
      %s936 = sld [smem:[#allocation4 + %s934]]
      %v937 = vstv %s936
      %v938 = vmul.f32 %v146, %v937
      %v939 = vmul.f32 %v147, %v937
      %v940 = vstv %s935
      %v941 = vmul.f32 %v940, %v916
      %v942 = vmul.f32 %v940, %v917
      %v943 = vmul.f32 %v940, %v918
      %v944 = vmul.f32 %v940, %v919
      %v945 = vmul.f32 %v938, %v928
      %v946 = vmul.f32 %v939, %v929
      %v947 = vmul.f32 %v938, %v930
      %v948 = vmul.f32 %v939, %v931
      %v949 = vadd.f32 %v941, %v945
      %v950 = vadd.f32 %v942, %v946
      %v951 = vadd.f32 %v943, %v947
      %v952 = vadd.f32 %v944, %v948
      %v953 = vmul.f32 %v940, %v928
      %v954 = vmul.f32 %v940, %v929
      %v955 = vmul.f32 %v940, %v930
      %v956 = vmul.f32 %v940, %v931
      %v957 = vmul.f32 %v938, %v916
      %v958 = vmul.f32 %v939, %v917
      %v959 = vmul.f32 %v938, %v918
      %v960 = vmul.f32 %v939, %v919
      %v961 = vsub.f32 %v953, %v957
      %v962 = vsub.f32 %v954, %v958
      %v963 = vsub.f32 %v955, %v959
      %v964 = vsub.f32 %v956, %v960
      %s965 = sadd.s32 %s862, 4
      %s966 = smul.u32 %s965, 128
      %s967 = sadd.s32 %s966, %s867
      %s968 = sld [smem:[#allocation2 + %s967]]
      %s969 = sld [smem:[#allocation4 + %s967]]
      %v970 = vstv %s969
      %v971 = vmul.f32 %v152, %v970
      %v972 = vmul.f32 %v153, %v970
      %v973 = vstv %s968
      %v974 = vmul.f32 %v973, %v949
      %v975 = vmul.f32 %v973, %v950
      %v976 = vmul.f32 %v973, %v951
      %v977 = vmul.f32 %v973, %v952
      %v978 = vmul.f32 %v971, %v961
      %v979 = vmul.f32 %v972, %v962
      %v980 = vmul.f32 %v971, %v963
      %v981 = vmul.f32 %v972, %v964
      %v982 = vadd.f32 %v974, %v978
      %v983 = vadd.f32 %v975, %v979
      %v984 = vadd.f32 %v976, %v980
      %v985 = vadd.f32 %v977, %v981
      %v986 = vmul.f32 %v973, %v961
      %v987 = vmul.f32 %v973, %v962
      %v988 = vmul.f32 %v973, %v963
      %v989 = vmul.f32 %v973, %v964
      %v990 = vmul.f32 %v971, %v949
      %v991 = vmul.f32 %v972, %v950
      %v992 = vmul.f32 %v971, %v951
      %v993 = vmul.f32 %v972, %v952
      %v994 = vsub.f32 %v986, %v990
      %v995 = vsub.f32 %v987, %v991
      %v996 = vsub.f32 %v988, %v992
      %v997 = vsub.f32 %v989, %v993
      %s998 = sadd.s32 %s862, 5
      %s999 = smul.u32 %s998, 128
      %s1000 = sadd.s32 %s999, %s867
      %s1001 = sld [smem:[#allocation2 + %s1000]]
      %s1002 = sld [smem:[#allocation4 + %s1000]]
      %v1003 = vstv %s1002
      %v1004 = vmul.f32 %v158, %v1003
      %v1005 = vmul.f32 %v159, %v1003
      %v1006 = vstv %s1001
      %v1007 = vmul.f32 %v1006, %v982
      %v1008 = vmul.f32 %v1006, %v983
      %v1009 = vmul.f32 %v1006, %v984
      %v1010 = vmul.f32 %v1006, %v985
      %v1011 = vmul.f32 %v1004, %v994
      %v1012 = vmul.f32 %v1005, %v995
      %v1013 = vmul.f32 %v1004, %v996
      %v1014 = vmul.f32 %v1005, %v997
      %v1015 = vadd.f32 %v1007, %v1011
      %v1016 = vadd.f32 %v1008, %v1012
      %v1017 = vadd.f32 %v1009, %v1013
      %v1018 = vadd.f32 %v1010, %v1014
      %v1019 = vmul.f32 %v1006, %v994
      %v1020 = vmul.f32 %v1006, %v995
      %v1021 = vmul.f32 %v1006, %v996
      %v1022 = vmul.f32 %v1006, %v997
      %v1023 = vmul.f32 %v1004, %v982
      %v1024 = vmul.f32 %v1005, %v983
      %v1025 = vmul.f32 %v1004, %v984
      %v1026 = vmul.f32 %v1005, %v985
      %v1027 = vsub.f32 %v1019, %v1023
      %v1028 = vsub.f32 %v1020, %v1024
      %v1029 = vsub.f32 %v1021, %v1025
      %v1030 = vsub.f32 %v1022, %v1026
      %s1031 = sadd.s32 %s862, 6
      %s1032 = smul.u32 %s1031, 128
      %s1033 = sadd.s32 %s1032, %s867
      %s1034 = sld [smem:[#allocation2 + %s1033]]
      %s1035 = sld [smem:[#allocation4 + %s1033]]
      %v1036 = vstv %s1035
      %v1037 = vmul.f32 %v164, %v1036
      %v1038 = vmul.f32 %v165, %v1036
      %v1039 = vstv %s1034
      %v1040 = vmul.f32 %v1039, %v1015
      %v1041 = vmul.f32 %v1039, %v1016
      %v1042 = vmul.f32 %v1039, %v1017
      %v1043 = vmul.f32 %v1039, %v1018
      %v1044 = vmul.f32 %v1037, %v1027
      %v1045 = vmul.f32 %v1038, %v1028
      %v1046 = vmul.f32 %v1037, %v1029
      %v1047 = vmul.f32 %v1038, %v1030
      %v1048 = vadd.f32 %v1040, %v1044
      %v1049 = vadd.f32 %v1041, %v1045
      %v1050 = vadd.f32 %v1042, %v1046
      %v1051 = vadd.f32 %v1043, %v1047
      %v1052 = vmul.f32 %v1039, %v1027
      %v1053 = vmul.f32 %v1039, %v1028
      %v1054 = vmul.f32 %v1039, %v1029
      %v1055 = vmul.f32 %v1039, %v1030
      %v1056 = vmul.f32 %v1037, %v1015
      %v1057 = vmul.f32 %v1038, %v1016
      %v1058 = vmul.f32 %v1037, %v1017
      %v1059 = vmul.f32 %v1038, %v1018
      %v1060 = vsub.f32 %v1052, %v1056
      %v1061 = vsub.f32 %v1053, %v1057
      %v1062 = vsub.f32 %v1054, %v1058
      %v1063 = vsub.f32 %v1055, %v1059
      %s1064 = sld [smem:[#allocation6 + %s819]]
      %s1065 = sld [smem:[#allocation7 + %s819]]
      %v1066 = vsub.f32 %v1049, %v1049
      %v1067 = vsub.f32 %v1048, %v1048
      %v1068 = vsub.f32 %v1051, %v1051
      %v1069 = vsub.f32 %v1050, %v1050
      %v1070 = vmul.f32 %v78, %v1066
      %v1071 = vmul.f32 %v79, %v1067
      %v1072 = vmul.f32 %v78, %v1068
      %v1073 = vmul.f32 %v79, %v1069
      %v1074 = vadd.f32 %v1049, %v1070
      %v1075 = vadd.f32 %v1048, %v1071
      %v1076 = vadd.f32 %v1051, %v1072
      %v1077 = vadd.f32 %v1050, %v1073
      %v1078 = vsub.f32 %v1061, %v1061
      %v1079 = vsub.f32 %v1060, %v1060
      %v1080 = vsub.f32 %v1063, %v1063
      %v1081 = vsub.f32 %v1062, %v1062
      %v1082 = vmul.f32 %v78, %v1078
      %v1083 = vmul.f32 %v79, %v1079
      %v1084 = vmul.f32 %v78, %v1080
      %v1085 = vmul.f32 %v79, %v1081
      %v1086 = vadd.f32 %v1061, %v1082
      %v1087 = vadd.f32 %v1060, %v1083
      %v1088 = vadd.f32 %v1063, %v1084
      %v1089 = vadd.f32 %v1062, %v1085
      %v1090 = vstv %s1064
      %v1091 = vmul.f32 %v1090, %v1048
      %v1092 = vmul.f32 %v1090, %v1049
      %v1093 = vmul.f32 %v1090, %v1050
      %v1094 = vmul.f32 %v1090, %v1051
      %v1095 = vstv %s1065
      %v1096 = vmul.f32 %v1095, %v1086
      %v1097 = vmul.f32 %v1095, %v1087
      %v1098 = vmul.f32 %v1095, %v1088
      %v1099 = vmul.f32 %v1095, %v1089
      %v1100 = vadd.f32 %v1091, %v1096
      %v1101 = vadd.f32 %v1092, %v1097
      %v1102 = vadd.f32 %v1093, %v1098
      %v1103 = vadd.f32 %v1094, %v1099
      %v1104 = vmul.f32 %v1090, %v1060
      %v1105 = vmul.f32 %v1090, %v1061
      %v1106 = vmul.f32 %v1090, %v1062
      %v1107 = vmul.f32 %v1090, %v1063
      %v1108 = vmul.f32 %v1095, %v1074
      %v1109 = vmul.f32 %v1095, %v1075
      %v1110 = vmul.f32 %v1095, %v1076
      %v1111 = vmul.f32 %v1095, %v1077
      %v1112 = vsub.f32 %v1104, %v1108
      %v1113 = vsub.f32 %v1105, %v1109
      %v1114 = vsub.f32 %v1106, %v1110
      %v1115 = vsub.f32 %v1107, %v1111
      %s1116 = sld [smem:[#allocation6 + %s868]]
      %s1117 = sld [smem:[#allocation7 + %s868]]
      %1118 = vrot.lane.b32.xlu0 %v1100, 64
      %v1119 = vpop.permute.xlu0 %1118
      %1120 = vrot.lane.b32.xlu0 %v1102, 64
      %v1121 = vpop.permute.xlu0 %1120
      %1122 = vrot.lane.b32.xlu0 %v1101, 64
      %v1123 = vpop.permute.xlu0 %1122
      %1124 = vrot.lane.b32.xlu0 %v1103, 64
      %v1125 = vpop.permute.xlu0 %1124
      %vm1126 = vcmp.lt.s32.totalorder %v72, 64
      %v1127 = vsel %vm1126, %v1119, %v1123
      %v1128 = vsel %vm1126, %v1121, %v1125
      %v1129 = vsel %vm1126, %v1123, %v1119
      %v1130 = vsel %vm1126, %v1125, %v1121
      %v1131 = vsub.f32 %v1129, %v1127
      %v1132 = vsub.f32 %v1127, %v1129
      %v1133 = vsub.f32 %v1130, %v1128
      %v1134 = vsub.f32 %v1128, %v1130
      %v1135 = vmul.f32 %v84, %v1131
      %v1136 = vmul.f32 %v85, %v1132
      %v1137 = vmul.f32 %v84, %v1133
      %v1138 = vmul.f32 %v85, %v1134
      %v1139 = vadd.f32 %v1127, %v1135
      %v1140 = vadd.f32 %v1129, %v1136
      %v1141 = vadd.f32 %v1128, %v1137
      %v1142 = vadd.f32 %v1130, %v1138
      %1143 = vrot.lane.b32.xlu0 %v1112, 64
      %v1144 = vpop.permute.xlu0 %1143
      %1145 = vrot.lane.b32.xlu0 %v1114, 64
      %v1146 = vpop.permute.xlu0 %1145
      %1147 = vrot.lane.b32.xlu0 %v1113, 64
      %v1148 = vpop.permute.xlu0 %1147
      %1149 = vrot.lane.b32.xlu0 %v1115, 64
      %v1150 = vpop.permute.xlu0 %1149
      %v1151 = vsel %vm1126, %v1144, %v1148
      %v1152 = vsel %vm1126, %v1146, %v1150
      %v1153 = vsel %vm1126, %v1148, %v1144
      %v1154 = vsel %vm1126, %v1150, %v1146
      %v1155 = vsub.f32 %v1153, %v1151
      %v1156 = vsub.f32 %v1151, %v1153
      %v1157 = vsub.f32 %v1154, %v1152
      %v1158 = vsub.f32 %v1152, %v1154
      %v1159 = vmul.f32 %v84, %v1155
      %v1160 = vmul.f32 %v85, %v1156
      %v1161 = vmul.f32 %v84, %v1157
      %v1162 = vmul.f32 %v85, %v1158
      %v1163 = vadd.f32 %v1151, %v1159
      %v1164 = vadd.f32 %v1153, %v1160
      %v1165 = vadd.f32 %v1152, %v1161
      %v1166 = vadd.f32 %v1154, %v1162
      %v1167 = vstv %s1116
      %v1168 = vmul.f32 %v1167, %v1100
      %v1169 = vmul.f32 %v1167, %v1101
      %v1170 = vmul.f32 %v1167, %v1102
      %v1171 = vmul.f32 %v1167, %v1103
      %v1172 = vstv %s1117
      %v1173 = vmul.f32 %v1172, %v1163
      %v1174 = vmul.f32 %v1172, %v1164
      %v1175 = vmul.f32 %v1172, %v1165
      %v1176 = vmul.f32 %v1172, %v1166
      %v1177 = vadd.f32 %v1168, %v1173
      %v1178 = vadd.f32 %v1169, %v1174
      %v1179 = vadd.f32 %v1170, %v1175
      %v1180 = vadd.f32 %v1171, %v1176
      %v1181 = vmul.f32 %v1167, %v1112
      %v1182 = vmul.f32 %v1167, %v1113
      %v1183 = vmul.f32 %v1167, %v1114
      %v1184 = vmul.f32 %v1167, %v1115
      %v1185 = vmul.f32 %v1172, %v1139
      %v1186 = vmul.f32 %v1172, %v1140
      %v1187 = vmul.f32 %v1172, %v1141
      %v1188 = vmul.f32 %v1172, %v1142
      %v1189 = vsub.f32 %v1181, %v1185
      %v1190 = vsub.f32 %v1182, %v1186
      %v1191 = vsub.f32 %v1183, %v1187
      %v1192 = vsub.f32 %v1184, %v1188
      %s1193 = sld [smem:[#allocation6 + %s901]]
      %s1194 = sld [smem:[#allocation7 + %s901]]
      %1195 = vrot.lane.b32.xlu0 %v1177, 96
      %v1196 = vpop.permute.xlu0 %1195
      %1197 = vrot.lane.b32.xlu0 %v1179, 96
      %v1198 = vpop.permute.xlu0 %1197
      %1199 = vrot.lane.b32.xlu0 %v1178, 96
      %v1200 = vpop.permute.xlu0 %1199
      %1201 = vrot.lane.b32.xlu0 %v1180, 96
      %v1202 = vpop.permute.xlu0 %1201
      %vm1203 = vcmp.lt.s32.totalorder %v72, 96
      %v1204 = vsel %vm1203, %v1196, %v1200
      %v1205 = vsel %vm1203, %v1198, %v1202
      %v1206 = vsel %vm1203, %v1200, %v1196
      %v1207 = vsel %vm1203, %v1202, %v1198
      %1208 = vrot.lane.b32.xlu0 %v1177, 32
      %v1209 = vpop.permute.xlu0 %1208
      %1210 = vrot.lane.b32.xlu0 %v1179, 32
      %v1211 = vpop.permute.xlu0 %1210
      %1212 = vrot.lane.b32.xlu0 %v1178, 32
      %v1213 = vpop.permute.xlu0 %1212
      %1214 = vrot.lane.b32.xlu0 %v1180, 32
      %v1215 = vpop.permute.xlu0 %1214
      %vm1216 = vcmp.lt.s32.totalorder %v72, 32
      %v1217 = vsel %vm1216, %v1209, %v1213
      %v1218 = vsel %vm1216, %v1211, %v1215
      %v1219 = vsel %vm1216, %v1213, %v1209
      %v1220 = vsel %vm1216, %v1215, %v1211
      %v1221 = vsub.f32 %v1219, %v1204
      %v1222 = vsub.f32 %v1217, %v1206
      %v1223 = vsub.f32 %v1220, %v1205
      %v1224 = vsub.f32 %v1218, %v1207
      %v1225 = vmul.f32 %v90, %v1221
      %v1226 = vmul.f32 %v91, %v1222
      %v1227 = vmul.f32 %v90, %v1223
      %v1228 = vmul.f32 %v91, %v1224
      %v1229 = vadd.f32 %v1204, %v1225
      %v1230 = vadd.f32 %v1206, %v1226
      %v1231 = vadd.f32 %v1205, %v1227
      %v1232 = vadd.f32 %v1207, %v1228
      %1233 = vrot.lane.b32.xlu0 %v1189, 96
      %v1234 = vpop.permute.xlu0 %1233
      %1235 = vrot.lane.b32.xlu0 %v1191, 96
      %v1236 = vpop.permute.xlu0 %1235
      %1237 = vrot.lane.b32.xlu0 %v1190, 96
      %v1238 = vpop.permute.xlu0 %1237
      %1239 = vrot.lane.b32.xlu0 %v1192, 96
      %v1240 = vpop.permute.xlu0 %1239
      %v1241 = vsel %vm1203, %v1234, %v1238
      %v1242 = vsel %vm1203, %v1236, %v1240
      %v1243 = vsel %vm1203, %v1238, %v1234
      %v1244 = vsel %vm1203, %v1240, %v1236
      %1245 = vrot.lane.b32.xlu0 %v1189, 32
      %v1246 = vpop.permute.xlu0 %1245
      %1247 = vrot.lane.b32.xlu0 %v1191, 32
      %v1248 = vpop.permute.xlu0 %1247
      %1249 = vrot.lane.b32.xlu0 %v1190, 32
      %v1250 = vpop.permute.xlu0 %1249
      %1251 = vrot.lane.b32.xlu0 %v1192, 32
      %v1252 = vpop.permute.xlu0 %1251
      %v1253 = vsel %vm1216, %v1246, %v1250
      %v1254 = vsel %vm1216, %v1248, %v1252
      %v1255 = vsel %vm1216, %v1250, %v1246
      %v1256 = vsel %vm1216, %v1252, %v1248
      %v1257 = vsub.f32 %v1255, %v1241
      %v1258 = vsub.f32 %v1253, %v1243
      %v1259 = vsub.f32 %v1256, %v1242
      %v1260 = vsub.f32 %v1254, %v1244
      %v1261 = vmul.f32 %v90, %v1257
      %v1262 = vmul.f32 %v91, %v1258
      %v1263 = vmul.f32 %v90, %v1259
      %v1264 = vmul.f32 %v91, %v1260
      %v1265 = vadd.f32 %v1241, %v1261
      %v1266 = vadd.f32 %v1243, %v1262
      %v1267 = vadd.f32 %v1242, %v1263
      %v1268 = vadd.f32 %v1244, %v1264
      %v1269 = vstv %s1193
      %v1270 = vmul.f32 %v1269, %v1177
      %v1271 = vmul.f32 %v1269, %v1178
      %v1272 = vmul.f32 %v1269, %v1179
      %v1273 = vmul.f32 %v1269, %v1180
      %v1274 = vstv %s1194
      %v1275 = vmul.f32 %v1274, %v1265
      %v1276 = vmul.f32 %v1274, %v1266
      %v1277 = vmul.f32 %v1274, %v1267
      %v1278 = vmul.f32 %v1274, %v1268
      %v1279 = vadd.f32 %v1270, %v1275
      %v1280 = vadd.f32 %v1271, %v1276
      %v1281 = vadd.f32 %v1272, %v1277
      %v1282 = vadd.f32 %v1273, %v1278
      %v1283 = vmul.f32 %v1269, %v1189
      %v1284 = vmul.f32 %v1269, %v1190
      %v1285 = vmul.f32 %v1269, %v1191
      %v1286 = vmul.f32 %v1269, %v1192
      %v1287 = vmul.f32 %v1274, %v1229
      %v1288 = vmul.f32 %v1274, %v1230
      %v1289 = vmul.f32 %v1274, %v1231
      %v1290 = vmul.f32 %v1274, %v1232
      %v1291 = vsub.f32 %v1283, %v1287
      %v1292 = vsub.f32 %v1284, %v1288
      %v1293 = vsub.f32 %v1285, %v1289
      %v1294 = vsub.f32 %v1286, %v1290
      %s1295 = sld [smem:[#allocation6 + %s934]]
      %s1296 = sld [smem:[#allocation7 + %s934]]
      %1297 = vrot.lane.b32.xlu0 %v1279, 112
      %v1298 = vpop.permute.xlu0 %1297
      %1299 = vrot.lane.b32.xlu0 %v1281, 112
      %v1300 = vpop.permute.xlu0 %1299
      %1301 = vrot.lane.b32.xlu0 %v1280, 112
      %v1302 = vpop.permute.xlu0 %1301
      %1303 = vrot.lane.b32.xlu0 %v1282, 112
      %v1304 = vpop.permute.xlu0 %1303
      %vm1305 = vcmp.lt.s32.totalorder %v72, 112
      %v1306 = vsel %vm1305, %v1298, %v1302
      %v1307 = vsel %vm1305, %v1300, %v1304
      %v1308 = vsel %vm1305, %v1302, %v1298
      %v1309 = vsel %vm1305, %v1304, %v1300
      %1310 = vrot.lane.b32.xlu0 %v1279, 16
      %v1311 = vpop.permute.xlu0 %1310
      %1312 = vrot.lane.b32.xlu0 %v1281, 16
      %v1313 = vpop.permute.xlu0 %1312
      %1314 = vrot.lane.b32.xlu0 %v1280, 16
      %v1315 = vpop.permute.xlu0 %1314
      %1316 = vrot.lane.b32.xlu0 %v1282, 16
      %v1317 = vpop.permute.xlu0 %1316
      %vm1318 = vcmp.lt.s32.totalorder %v72, 16
      %v1319 = vsel %vm1318, %v1311, %v1315
      %v1320 = vsel %vm1318, %v1313, %v1317
      %v1321 = vsel %vm1318, %v1315, %v1311
      %v1322 = vsel %vm1318, %v1317, %v1313
      %v1323 = vsub.f32 %v1321, %v1306
      %v1324 = vsub.f32 %v1319, %v1308
      %v1325 = vsub.f32 %v1322, %v1307
      %v1326 = vsub.f32 %v1320, %v1309
      %v1327 = vmul.f32 %v96, %v1323
      %v1328 = vmul.f32 %v97, %v1324
      %v1329 = vmul.f32 %v96, %v1325
      %v1330 = vmul.f32 %v97, %v1326
      %v1331 = vadd.f32 %v1306, %v1327
      %v1332 = vadd.f32 %v1308, %v1328
      %v1333 = vadd.f32 %v1307, %v1329
      %v1334 = vadd.f32 %v1309, %v1330
      %1335 = vrot.lane.b32.xlu0 %v1291, 112
      %v1336 = vpop.permute.xlu0 %1335
      %1337 = vrot.lane.b32.xlu0 %v1293, 112
      %v1338 = vpop.permute.xlu0 %1337
      %1339 = vrot.lane.b32.xlu0 %v1292, 112
      %v1340 = vpop.permute.xlu0 %1339
      %1341 = vrot.lane.b32.xlu0 %v1294, 112
      %v1342 = vpop.permute.xlu0 %1341
      %v1343 = vsel %vm1305, %v1336, %v1340
      %v1344 = vsel %vm1305, %v1338, %v1342
      %v1345 = vsel %vm1305, %v1340, %v1336
      %v1346 = vsel %vm1305, %v1342, %v1338
      %1347 = vrot.lane.b32.xlu0 %v1291, 16
      %v1348 = vpop.permute.xlu0 %1347
      %1349 = vrot.lane.b32.xlu0 %v1293, 16
      %v1350 = vpop.permute.xlu0 %1349
      %1351 = vrot.lane.b32.xlu0 %v1292, 16
      %v1352 = vpop.permute.xlu0 %1351
      %1353 = vrot.lane.b32.xlu0 %v1294, 16
      %v1354 = vpop.permute.xlu0 %1353
      %v1355 = vsel %vm1318, %v1348, %v1352
      %v1356 = vsel %vm1318, %v1350, %v1354
      %v1357 = vsel %vm1318, %v1352, %v1348
      %v1358 = vsel %vm1318, %v1354, %v1350
      %v1359 = vsub.f32 %v1357, %v1343
      %v1360 = vsub.f32 %v1355, %v1345
      %v1361 = vsub.f32 %v1358, %v1344
      %v1362 = vsub.f32 %v1356, %v1346
      %v1363 = vmul.f32 %v96, %v1359
      %v1364 = vmul.f32 %v97, %v1360
      %v1365 = vmul.f32 %v96, %v1361
      %v1366 = vmul.f32 %v97, %v1362
      %v1367 = vadd.f32 %v1343, %v1363
      %v1368 = vadd.f32 %v1345, %v1364
      %v1369 = vadd.f32 %v1344, %v1365
      %v1370 = vadd.f32 %v1346, %v1366
      %v1371 = vstv %s1295
      %v1372 = vmul.f32 %v1371, %v1279
      %v1373 = vmul.f32 %v1371, %v1280
      %v1374 = vmul.f32 %v1371, %v1281
      %v1375 = vmul.f32 %v1371, %v1282
      %v1376 = vstv %s1296
      %v1377 = vmul.f32 %v1376, %v1367
      %v1378 = vmul.f32 %v1376, %v1368
      %v1379 = vmul.f32 %v1376, %v1369
      %v1380 = vmul.f32 %v1376, %v1370
      %v1381 = vadd.f32 %v1372, %v1377
      %v1382 = vadd.f32 %v1373, %v1378
      %v1383 = vadd.f32 %v1374, %v1379
      %v1384 = vadd.f32 %v1375, %v1380
      %v1385 = vmul.f32 %v1371, %v1291
      %v1386 = vmul.f32 %v1371, %v1292
      %v1387 = vmul.f32 %v1371, %v1293
      %v1388 = vmul.f32 %v1371, %v1294
      %v1389 = vmul.f32 %v1376, %v1331
      %v1390 = vmul.f32 %v1376, %v1332
      %v1391 = vmul.f32 %v1376, %v1333
      %v1392 = vmul.f32 %v1376, %v1334
      %v1393 = vsub.f32 %v1385, %v1389
      %v1394 = vsub.f32 %v1386, %v1390
      %v1395 = vsub.f32 %v1387, %v1391
      %v1396 = vsub.f32 %v1388, %v1392
      %s1397 = sld [smem:[#allocation6 + %s967]]
      %s1398 = sld [smem:[#allocation7 + %s967]]
      %1399 = vrot.lane.b32.xlu0 %v1381, 120
      %v1400 = vpop.permute.xlu0 %1399
      %1401 = vrot.lane.b32.xlu0 %v1383, 120
      %v1402 = vpop.permute.xlu0 %1401
      %1403 = vrot.lane.b32.xlu0 %v1382, 120
      %v1404 = vpop.permute.xlu0 %1403
      %1405 = vrot.lane.b32.xlu0 %v1384, 120
      %v1406 = vpop.permute.xlu0 %1405
      %vm1407 = vcmp.lt.s32.totalorder %v72, 120
      %v1408 = vsel %vm1407, %v1400, %v1404
      %v1409 = vsel %vm1407, %v1402, %v1406
      %v1410 = vsel %vm1407, %v1404, %v1400
      %v1411 = vsel %vm1407, %v1406, %v1402
      %1412 = vrot.lane.b32.xlu0 %v1381, 8
      %v1413 = vpop.permute.xlu0 %1412
      %1414 = vrot.lane.b32.xlu0 %v1383, 8
      %v1415 = vpop.permute.xlu0 %1414
      %1416 = vrot.lane.b32.xlu0 %v1382, 8
      %v1417 = vpop.permute.xlu0 %1416
      %1418 = vrot.lane.b32.xlu0 %v1384, 8
      %v1419 = vpop.permute.xlu0 %1418
      %vm1420 = vcmp.lt.s32.totalorder %v72, 8
      %v1421 = vsel %vm1420, %v1413, %v1417
      %v1422 = vsel %vm1420, %v1415, %v1419
      %v1423 = vsel %vm1420, %v1417, %v1413
      %v1424 = vsel %vm1420, %v1419, %v1415
      %v1425 = vsub.f32 %v1423, %v1408
      %v1426 = vsub.f32 %v1421, %v1410
      %v1427 = vsub.f32 %v1424, %v1409
      %v1428 = vsub.f32 %v1422, %v1411
      %v1429 = vmul.f32 %v102, %v1425
      %v1430 = vmul.f32 %v103, %v1426
      %v1431 = vmul.f32 %v102, %v1427
      %v1432 = vmul.f32 %v103, %v1428
      %v1433 = vadd.f32 %v1408, %v1429
      %v1434 = vadd.f32 %v1410, %v1430
      %v1435 = vadd.f32 %v1409, %v1431
      %v1436 = vadd.f32 %v1411, %v1432
      %1437 = vrot.lane.b32.xlu0 %v1393, 120
      %v1438 = vpop.permute.xlu0 %1437
      %1439 = vrot.lane.b32.xlu0 %v1395, 120
      %v1440 = vpop.permute.xlu0 %1439
      %1441 = vrot.lane.b32.xlu0 %v1394, 120
      %v1442 = vpop.permute.xlu0 %1441
      %1443 = vrot.lane.b32.xlu0 %v1396, 120
      %v1444 = vpop.permute.xlu0 %1443
      %v1445 = vsel %vm1407, %v1438, %v1442
      %v1446 = vsel %vm1407, %v1440, %v1444
      %v1447 = vsel %vm1407, %v1442, %v1438
      %v1448 = vsel %vm1407, %v1444, %v1440
      %1449 = vrot.lane.b32.xlu0 %v1393, 8
      %v1450 = vpop.permute.xlu0 %1449
      %1451 = vrot.lane.b32.xlu0 %v1395, 8
      %v1452 = vpop.permute.xlu0 %1451
      %1453 = vrot.lane.b32.xlu0 %v1394, 8
      %v1454 = vpop.permute.xlu0 %1453
      %1455 = vrot.lane.b32.xlu0 %v1396, 8
      %v1456 = vpop.permute.xlu0 %1455
      %v1457 = vsel %vm1420, %v1450, %v1454
      %v1458 = vsel %vm1420, %v1452, %v1456
      %v1459 = vsel %vm1420, %v1454, %v1450
      %v1460 = vsel %vm1420, %v1456, %v1452
      %v1461 = vsub.f32 %v1459, %v1445
      %v1462 = vsub.f32 %v1457, %v1447
      %v1463 = vsub.f32 %v1460, %v1446
      %v1464 = vsub.f32 %v1458, %v1448
      %v1465 = vmul.f32 %v102, %v1461
      %v1466 = vmul.f32 %v103, %v1462
      %v1467 = vmul.f32 %v102, %v1463
      %v1468 = vmul.f32 %v103, %v1464
      %v1469 = vadd.f32 %v1445, %v1465
      %v1470 = vadd.f32 %v1447, %v1466
      %v1471 = vadd.f32 %v1446, %v1467
      %v1472 = vadd.f32 %v1448, %v1468
      %v1473 = vstv %s1397
      %v1474 = vmul.f32 %v1473, %v1381
      %v1475 = vmul.f32 %v1473, %v1382
      %v1476 = vmul.f32 %v1473, %v1383
      %v1477 = vmul.f32 %v1473, %v1384
      %v1478 = vstv %s1398
      %v1479 = vmul.f32 %v1478, %v1469
      %v1480 = vmul.f32 %v1478, %v1470
      %v1481 = vmul.f32 %v1478, %v1471
      %v1482 = vmul.f32 %v1478, %v1472
      %v1483 = vadd.f32 %v1474, %v1479
      %v1484 = vadd.f32 %v1475, %v1480
      %v1485 = vadd.f32 %v1476, %v1481
      %v1486 = vadd.f32 %v1477, %v1482
      %v1487 = vmul.f32 %v1473, %v1393
      %v1488 = vmul.f32 %v1473, %v1394
      %v1489 = vmul.f32 %v1473, %v1395
      %v1490 = vmul.f32 %v1473, %v1396
      %v1491 = vmul.f32 %v1478, %v1433
      %v1492 = vmul.f32 %v1478, %v1434
      %v1493 = vmul.f32 %v1478, %v1435
      %v1494 = vmul.f32 %v1478, %v1436
      %v1495 = vsub.f32 %v1487, %v1491
      %v1496 = vsub.f32 %v1488, %v1492
      %v1497 = vsub.f32 %v1489, %v1493
      %v1498 = vsub.f32 %v1490, %v1494
      %s1499 = sld [smem:[#allocation6 + %s1000]]
      %s1500 = sld [smem:[#allocation7 + %s1000]]
      %1501 = vrot.lane.b32.xlu0 %v1483, 124
      %v1502 = vpop.permute.xlu0 %1501
      %1503 = vrot.lane.b32.xlu0 %v1485, 124
      %v1504 = vpop.permute.xlu0 %1503
      %1505 = vrot.lane.b32.xlu0 %v1484, 124
      %v1506 = vpop.permute.xlu0 %1505
      %1507 = vrot.lane.b32.xlu0 %v1486, 124
      %v1508 = vpop.permute.xlu0 %1507
      %vm1509 = vcmp.lt.s32.totalorder %v72, 124
      %v1510 = vsel %vm1509, %v1502, %v1506
      %v1511 = vsel %vm1509, %v1504, %v1508
      %v1512 = vsel %vm1509, %v1506, %v1502
      %v1513 = vsel %vm1509, %v1508, %v1504
      %1514 = vrot.lane.b32.xlu0 %v1483, 4
      %v1515 = vpop.permute.xlu0 %1514
      %1516 = vrot.lane.b32.xlu0 %v1485, 4
      %v1517 = vpop.permute.xlu0 %1516
      %1518 = vrot.lane.b32.xlu0 %v1484, 4
      %v1519 = vpop.permute.xlu0 %1518
      %1520 = vrot.lane.b32.xlu0 %v1486, 4
      %v1521 = vpop.permute.xlu0 %1520
      %vm1522 = vcmp.lt.s32.totalorder %v72, 4
      %v1523 = vsel %vm1522, %v1515, %v1519
      %v1524 = vsel %vm1522, %v1517, %v1521
      %v1525 = vsel %vm1522, %v1519, %v1515
      %v1526 = vsel %vm1522, %v1521, %v1517
      %v1527 = vsub.f32 %v1525, %v1510
      %v1528 = vsub.f32 %v1523, %v1512
      %v1529 = vsub.f32 %v1526, %v1511
      %v1530 = vsub.f32 %v1524, %v1513
      %v1531 = vmul.f32 %v108, %v1527
      %v1532 = vmul.f32 %v109, %v1528
      %v1533 = vmul.f32 %v108, %v1529
      %v1534 = vmul.f32 %v109, %v1530
      %v1535 = vadd.f32 %v1510, %v1531
      %v1536 = vadd.f32 %v1512, %v1532
      %v1537 = vadd.f32 %v1511, %v1533
      %v1538 = vadd.f32 %v1513, %v1534
      %1539 = vrot.lane.b32.xlu0 %v1495, 124
      %v1540 = vpop.permute.xlu0 %1539
      %1541 = vrot.lane.b32.xlu0 %v1497, 124
      %v1542 = vpop.permute.xlu0 %1541
      %1543 = vrot.lane.b32.xlu0 %v1496, 124
      %v1544 = vpop.permute.xlu0 %1543
      %1545 = vrot.lane.b32.xlu0 %v1498, 124
      %v1546 = vpop.permute.xlu0 %1545
      %v1547 = vsel %vm1509, %v1540, %v1544
      %v1548 = vsel %vm1509, %v1542, %v1546
      %v1549 = vsel %vm1509, %v1544, %v1540
      %v1550 = vsel %vm1509, %v1546, %v1542
      %1551 = vrot.lane.b32.xlu0 %v1495, 4
      %v1552 = vpop.permute.xlu0 %1551
      %1553 = vrot.lane.b32.xlu0 %v1497, 4
      %v1554 = vpop.permute.xlu0 %1553
      %1555 = vrot.lane.b32.xlu0 %v1496, 4
      %v1556 = vpop.permute.xlu0 %1555
      %1557 = vrot.lane.b32.xlu0 %v1498, 4
      %v1558 = vpop.permute.xlu0 %1557
      %v1559 = vsel %vm1522, %v1552, %v1556
      %v1560 = vsel %vm1522, %v1554, %v1558
      %v1561 = vsel %vm1522, %v1556, %v1552
      %v1562 = vsel %vm1522, %v1558, %v1554
      %v1563 = vsub.f32 %v1561, %v1547
      %v1564 = vsub.f32 %v1559, %v1549
      %v1565 = vsub.f32 %v1562, %v1548
      %v1566 = vsub.f32 %v1560, %v1550
      %v1567 = vmul.f32 %v108, %v1563
      %v1568 = vmul.f32 %v109, %v1564
      %v1569 = vmul.f32 %v108, %v1565
      %v1570 = vmul.f32 %v109, %v1566
      %v1571 = vadd.f32 %v1547, %v1567
      %v1572 = vadd.f32 %v1549, %v1568
      %v1573 = vadd.f32 %v1548, %v1569
      %v1574 = vadd.f32 %v1550, %v1570
      %v1575 = vstv %s1499
      %v1576 = vmul.f32 %v1575, %v1483
      %v1577 = vmul.f32 %v1575, %v1484
      %v1578 = vmul.f32 %v1575, %v1485
      %v1579 = vmul.f32 %v1575, %v1486
      %v1580 = vstv %s1500
      %v1581 = vmul.f32 %v1580, %v1571
      %v1582 = vmul.f32 %v1580, %v1572
      %v1583 = vmul.f32 %v1580, %v1573
      %v1584 = vmul.f32 %v1580, %v1574
      %v1585 = vadd.f32 %v1576, %v1581
      %v1586 = vadd.f32 %v1577, %v1582
      %v1587 = vadd.f32 %v1578, %v1583
      %v1588 = vadd.f32 %v1579, %v1584
      %v1589 = vmul.f32 %v1575, %v1495
      %v1590 = vmul.f32 %v1575, %v1496
      %v1591 = vmul.f32 %v1575, %v1497
      %v1592 = vmul.f32 %v1575, %v1498
      %v1593 = vmul.f32 %v1580, %v1535
      %v1594 = vmul.f32 %v1580, %v1536
      %v1595 = vmul.f32 %v1580, %v1537
      %v1596 = vmul.f32 %v1580, %v1538
      %v1597 = vsub.f32 %v1589, %v1593
      %v1598 = vsub.f32 %v1590, %v1594
      %v1599 = vsub.f32 %v1591, %v1595
      %v1600 = vsub.f32 %v1592, %v1596
      %s1601 = sld [smem:[#allocation6 + %s1033]]
      %s1602 = sld [smem:[#allocation7 + %s1033]]
      %1603 = vrot.lane.b32.xlu0 %v1585, 126
      %v1604 = vpop.permute.xlu0 %1603
      %1605 = vrot.lane.b32.xlu0 %v1587, 126
      %v1606 = vpop.permute.xlu0 %1605
      %1607 = vrot.lane.b32.xlu0 %v1586, 126
      %v1608 = vpop.permute.xlu0 %1607
      %1609 = vrot.lane.b32.xlu0 %v1588, 126
      %v1610 = vpop.permute.xlu0 %1609
      %vm1611 = vcmp.lt.s32.totalorder %v72, 126
      %v1612 = vsel %vm1611, %v1604, %v1608
      %v1613 = vsel %vm1611, %v1606, %v1610
      %v1614 = vsel %vm1611, %v1608, %v1604
      %v1615 = vsel %vm1611, %v1610, %v1606
      %1616 = vrot.lane.b32.xlu0 %v1585, 2
      %v1617 = vpop.permute.xlu0 %1616
      %1618 = vrot.lane.b32.xlu0 %v1587, 2
      %v1619 = vpop.permute.xlu0 %1618
      %1620 = vrot.lane.b32.xlu0 %v1586, 2
      %v1621 = vpop.permute.xlu0 %1620
      %1622 = vrot.lane.b32.xlu0 %v1588, 2
      %v1623 = vpop.permute.xlu0 %1622
      %vm1624 = vcmp.lt.s32.totalorder %v72, 2
      %v1625 = vsel %vm1624, %v1617, %v1621
      %v1626 = vsel %vm1624, %v1619, %v1623
      %v1627 = vsel %vm1624, %v1621, %v1617
      %v1628 = vsel %vm1624, %v1623, %v1619
      %v1629 = vsub.f32 %v1627, %v1612
      %v1630 = vsub.f32 %v1625, %v1614
      %v1631 = vsub.f32 %v1628, %v1613
      %v1632 = vsub.f32 %v1626, %v1615
      %v1633 = vmul.f32 %v114, %v1629
      %v1634 = vmul.f32 %v115, %v1630
      %v1635 = vmul.f32 %v114, %v1631
      %v1636 = vmul.f32 %v115, %v1632
      %v1637 = vadd.f32 %v1612, %v1633
      %v1638 = vadd.f32 %v1614, %v1634
      %v1639 = vadd.f32 %v1613, %v1635
      %v1640 = vadd.f32 %v1615, %v1636
      %1641 = vrot.lane.b32.xlu0 %v1597, 126
      %v1642 = vpop.permute.xlu0 %1641
      %1643 = vrot.lane.b32.xlu0 %v1599, 126
      %v1644 = vpop.permute.xlu0 %1643
      %1645 = vrot.lane.b32.xlu0 %v1598, 126
      %v1646 = vpop.permute.xlu0 %1645
      %1647 = vrot.lane.b32.xlu0 %v1600, 126
      %v1648 = vpop.permute.xlu0 %1647
      %v1649 = vsel %vm1611, %v1642, %v1646
      %v1650 = vsel %vm1611, %v1644, %v1648
      %v1651 = vsel %vm1611, %v1646, %v1642
      %v1652 = vsel %vm1611, %v1648, %v1644
      %1653 = vrot.lane.b32.xlu0 %v1597, 2
      %v1654 = vpop.permute.xlu0 %1653
      %1655 = vrot.lane.b32.xlu0 %v1599, 2
      %v1656 = vpop.permute.xlu0 %1655
      %1657 = vrot.lane.b32.xlu0 %v1598, 2
      %v1658 = vpop.permute.xlu0 %1657
      %1659 = vrot.lane.b32.xlu0 %v1600, 2
      %v1660 = vpop.permute.xlu0 %1659
      %v1661 = vsel %vm1624, %v1654, %v1658
      %v1662 = vsel %vm1624, %v1656, %v1660
      %v1663 = vsel %vm1624, %v1658, %v1654
      %v1664 = vsel %vm1624, %v1660, %v1656
      %v1665 = vsub.f32 %v1663, %v1649
      %v1666 = vsub.f32 %v1661, %v1651
      %v1667 = vsub.f32 %v1664, %v1650
      %v1668 = vsub.f32 %v1662, %v1652
      %v1669 = vmul.f32 %v114, %v1665
      %v1670 = vmul.f32 %v115, %v1666
      %v1671 = vmul.f32 %v114, %v1667
      %v1672 = vmul.f32 %v115, %v1668
      %v1673 = vadd.f32 %v1649, %v1669
      %v1674 = vadd.f32 %v1651, %v1670
      %v1675 = vadd.f32 %v1650, %v1671
      %v1676 = vadd.f32 %v1652, %v1672
      %v1677 = vstv %s1601
      %v1678 = vmul.f32 %v1677, %v1585
      %v1679 = vmul.f32 %v1677, %v1586
      %v1680 = vmul.f32 %v1677, %v1587
      %v1681 = vmul.f32 %v1677, %v1588
      %v1682 = vstv %s1602
      %v1683 = vmul.f32 %v1682, %v1673
      %v1684 = vmul.f32 %v1682, %v1674
      %v1685 = vmul.f32 %v1682, %v1675
      %v1686 = vmul.f32 %v1682, %v1676
      %v1687 = vadd.f32 %v1678, %v1683
      %v1688 = vadd.f32 %v1679, %v1684
      %v1689 = vadd.f32 %v1680, %v1685
      %v1690 = vadd.f32 %v1681, %v1686
      %v1691 = vmul.f32 %v1677, %v1597
      %v1692 = vmul.f32 %v1677, %v1598
      %v1693 = vmul.f32 %v1677, %v1599
      %v1694 = vmul.f32 %v1677, %v1600
      %v1695 = vmul.f32 %v1682, %v1637
      %v1696 = vmul.f32 %v1682, %v1638
      %v1697 = vmul.f32 %v1682, %v1639
      %v1698 = vmul.f32 %v1682, %v1640
      %v1699 = vsub.f32 %v1691, %v1695
      %v1700 = vsub.f32 %v1692, %v1696
      %v1701 = vsub.f32 %v1693, %v1697
      %v1702 = vsub.f32 %v1694, %v1698
      %s1703 = sadd.s32 %s862, 7
      %s1704 = smul.u32 %s1703, 128
      %s1705 = sadd.s32 %s1704, %s867
      %s1706 = sld [smem:[#allocation6 + %s1705]]
      %s1707 = sld [smem:[#allocation7 + %s1705]]
      %1708 = vrot.lane.b32.xlu0 %v1687, 127
      %v1709 = vpop.permute.xlu0 %1708
      %1710 = vrot.lane.b32.xlu0 %v1689, 127
      %v1711 = vpop.permute.xlu0 %1710
      %1712 = vrot.lane.b32.xlu0 %v1688, 127
      %v1713 = vpop.permute.xlu0 %1712
      %1714 = vrot.lane.b32.xlu0 %v1690, 127
      %v1715 = vpop.permute.xlu0 %1714
      %vm1716 = vcmp.lt.s32.totalorder %v72, 127
      %v1717 = vsel %vm1716, %v1709, %v1713
      %v1718 = vsel %vm1716, %v1711, %v1715
      %v1719 = vsel %vm1716, %v1713, %v1709
      %v1720 = vsel %vm1716, %v1715, %v1711
      %1721 = vrot.lane.b32.xlu0 %v1687, 1
      %v1722 = vpop.permute.xlu0 %1721
      %1723 = vrot.lane.b32.xlu0 %v1689, 1
      %v1724 = vpop.permute.xlu0 %1723
      %1725 = vrot.lane.b32.xlu0 %v1688, 1
      %v1726 = vpop.permute.xlu0 %1725
      %1727 = vrot.lane.b32.xlu0 %v1690, 1
      %v1728 = vpop.permute.xlu0 %1727
      %vm1729 = vcmp.lt.s32.totalorder %v72, 1
      %v1730 = vsel %vm1729, %v1722, %v1726
      %v1731 = vsel %vm1729, %v1724, %v1728
      %v1732 = vsel %vm1729, %v1726, %v1722
      %v1733 = vsel %vm1729, %v1728, %v1724
      %v1734 = vsub.f32 %v1732, %v1717
      %v1735 = vsub.f32 %v1730, %v1719
      %v1736 = vsub.f32 %v1733, %v1718
      %v1737 = vsub.f32 %v1731, %v1720
      %v1738 = vmul.f32 %v118, %v1734
      %v1739 = vmul.f32 %v119, %v1735
      %v1740 = vmul.f32 %v118, %v1736
      %v1741 = vmul.f32 %v119, %v1737
      %v1742 = vadd.f32 %v1717, %v1738
      %v1743 = vadd.f32 %v1719, %v1739
      %v1744 = vadd.f32 %v1718, %v1740
      %v1745 = vadd.f32 %v1720, %v1741
      %1746 = vrot.lane.b32.xlu0 %v1699, 127
      %v1747 = vpop.permute.xlu0 %1746
      %1748 = vrot.lane.b32.xlu0 %v1701, 127
      %v1749 = vpop.permute.xlu0 %1748
      %1750 = vrot.lane.b32.xlu0 %v1700, 127
      %v1751 = vpop.permute.xlu0 %1750
      %1752 = vrot.lane.b32.xlu0 %v1702, 127
      %v1753 = vpop.permute.xlu0 %1752
      %v1754 = vsel %vm1716, %v1747, %v1751
      %v1755 = vsel %vm1716, %v1749, %v1753
      %v1756 = vsel %vm1716, %v1751, %v1747
      %v1757 = vsel %vm1716, %v1753, %v1749
      %1758 = vrot.lane.b32.xlu0 %v1699, 1
      %v1759 = vpop.permute.xlu0 %1758
      %1760 = vrot.lane.b32.xlu0 %v1701, 1
      %v1761 = vpop.permute.xlu0 %1760
      %1762 = vrot.lane.b32.xlu0 %v1700, 1
      %v1763 = vpop.permute.xlu0 %1762
      %1764 = vrot.lane.b32.xlu0 %v1702, 1
      %v1765 = vpop.permute.xlu0 %1764
      %v1766 = vsel %vm1729, %v1759, %v1763
      %v1767 = vsel %vm1729, %v1761, %v1765
      %v1768 = vsel %vm1729, %v1763, %v1759
      %v1769 = vsel %vm1729, %v1765, %v1761
      %v1770 = vsub.f32 %v1768, %v1754
      %v1771 = vsub.f32 %v1766, %v1756
      %v1772 = vsub.f32 %v1769, %v1755
      %v1773 = vsub.f32 %v1767, %v1757
      %v1774 = vmul.f32 %v118, %v1770
      %v1775 = vmul.f32 %v119, %v1771
      %v1776 = vmul.f32 %v118, %v1772
      %v1777 = vmul.f32 %v119, %v1773
      %v1778 = vadd.f32 %v1754, %v1774
      %v1779 = vadd.f32 %v1756, %v1775
      %v1780 = vadd.f32 %v1755, %v1776
      %v1781 = vadd.f32 %v1757, %v1777
      %v1782 = vstv %s1706
      %v1783 = vmul.f32 %v1782, %v1687
      %v1784 = vmul.f32 %v1782, %v1688
      %v1785 = vmul.f32 %v1782, %v1689
      %v1786 = vmul.f32 %v1782, %v1690
      %v1787 = vstv %s1707
      %v1788 = vmul.f32 %v1787, %v1778
      %v1789 = vmul.f32 %v1787, %v1779
      %v1790 = vmul.f32 %v1787, %v1780
      %v1791 = vmul.f32 %v1787, %v1781
      %v1792 = vadd.f32 %v1783, %v1788
      %v1793 = vadd.f32 %v1784, %v1789
      %v1794 = vadd.f32 %v1785, %v1790
      %v1795 = vadd.f32 %v1786, %v1791
      %v1796 = vmul.f32 %v1782, %v1699
      %v1797 = vmul.f32 %v1782, %v1700
      %v1798 = vmul.f32 %v1782, %v1701
      %v1799 = vmul.f32 %v1782, %v1702
      %v1800 = vmul.f32 %v1787, %v1742
      %v1801 = vmul.f32 %v1787, %v1743
      %v1802 = vmul.f32 %v1787, %v1744
      %v1803 = vmul.f32 %v1787, %v1745
      %v1804 = vsub.f32 %v1796, %v1800
      %v1805 = vsub.f32 %v1797, %v1801
      %v1806 = vsub.f32 %v1798, %v1802
      %v1807 = vsub.f32 %v1799, %v1803
    $region46: #{tpu_custom_call.1} parent=1 // loop_footer
      %s823 = sadd.s32 1, %s819
    $region47: #{tpu_custom_call.1} parent=1 // loop_footer_branch
      %818 = sbr.rel target = $region43
    $region48: #{tpu_custom_call.1} parent=1 // loop_exit
      _
    %v1808 = vmul.f32 %v826, %v824
    %v1809 = vmul.f32 %v827, %v825
    %v1810 = vmul.f32 %v830, %v828
    %v1811 = vmul.f32 %v831, %v829
    %v1812 = vadd.f32 %v1808, %v1810
    %v1813 = vadd.f32 %v1809, %v1811
    %v1814 = vadd.f32 %v1812, %v1813
    %1815 = vadd.xlane.f32.xlu0 %v1814
    %v1816 = vpop.xlane.xlu0 %1815
    %v1817 = vmul.f32 %v826, %v828
    %v1818 = vmul.f32 %v827, %v829
    %v1819 = vmul.f32 %v830, %v824
    %v1820 = vmul.f32 %v831, %v825
    %v1821 = vsub.f32 %v1817, %v1819
    %v1822 = vsub.f32 %v1818, %v1820
    %v1823 = vadd.f32 %v1821, %v1822
    %1824 = vadd.xlane.f32.xlu0 %v1823
    %v1825 = vpop.xlane.xlu0 %1824
    %vm1826 = vcmask 7168
    %v1827 = vsel %vm1826, %v1816, %v1825
    %vm1828 = vcmask 15360
    %1829 = vst.msk [vmem:[%s6] sm:$0xff] %vm1828, %v1827
    // Predicated region
    $region49: #{tpu_custom_call.1} parent=1 // pred_check
      _
    $region50: #{tpu_custom_call.1} parent=1 // pred_check_branch
      %1831 = sbr.rel (0) target = $region52
    $region51: #{tpu_custom_call.1} parent=1 // pred_region
      _
    $region52: #{tpu_custom_call.1} parent=1 // pred_fallthru
      _
    // Predicated region
    $region53: #{tpu_custom_call.1} parent=1 // pred_check
      _
    $region54: #{tpu_custom_call.1} parent=1 // pred_check_branch
      %1833 = sbr.rel (0) target = $region56
    $region55: #{tpu_custom_call.1} parent=1 // pred_region
      _
    $region56: #{tpu_custom_call.1} parent=1 // pred_fallthru
      _
    %1834 = vsyncpa [#allocation3], 1
    %1835 = vsyncpa [#allocation5], 1
    %1836 = vsyncpa [#allocation8], 1

</llo_original>
